<compile_context>
chip_gen: v7x
topology: tpu7x:2x2x1
jax: 0.10.0
libtpu: 0.0.40
codegen_flags: <defaults>
</compile_context>

<pallas_src>
import jax
import jax.numpy as jnp
from jax.experimental import pallas as pl
from jax.experimental.pallas import tpu as pltpu


def anomaly_head_kernel(h_ref, mask_ref, w1_ref, b1_ref, w2_ref, b2_ref,
                        out_ref, summed_ref, counts_ref):
    s = pl.program_id(1)

    @pl.when(s == 0)
    def _init():
        summed_ref[...] = jnp.zeros_like(summed_ref)
        counts_ref[...] = jnp.zeros_like(counts_ref)

    # Streamed tile: (Bt, St, E) hidden state (bf16), (Bt, St, 1) mask (bf16).
    h = h_ref[...].astype(jnp.float32)          # f32 accumulation regardless of stream dtype
    m = mask_ref[...].astype(jnp.float32)       # .type_as(last_hidden_state)

    summed_ref[...] += jnp.sum(h * m, axis=1)   # (Bt, E)
    counts_ref[...] += jnp.sum(m, axis=1)       # (Bt, 1)

    @pl.when(s == pl.num_programs(1) - 1)
    def _finalize():
        counts = jnp.maximum(counts_ref[...], 1e-9)                     # clamp(min=1e-9)
        pooled = summed_ref[...] * pl.reciprocal(counts, approx=False)  # (Bt, E)

        # classifier: Linear -> ReLU -> (Dropout: identity in eval) -> Linear
        hdn = jnp.dot(pooled, w1_ref[...],
                      preferred_element_type=jnp.float32) + b1_ref[...]
        hdn = jnp.maximum(hdn, 0.0)
        logits = jnp.dot(hdn, w2_ref[...],
                         preferred_element_type=jnp.float32) + b2_ref[...]
        out_ref[...] = logits.astype(out_ref.dtype)


def _round_up(x, m):
    return (x + m - 1) // m * m


def _pick_seq_tile(S, Bt, E, h_itemsize, mask_itemsize, budget_bytes):
    """Largest St that divides S, is a multiple of 8 (or equals S), and keeps the
    double-buffered hidden-state tile plus the lane-padded mask tile within the
    streaming-VMEM budget."""
    fallback = None
    for st in range(S, 0, -1):
        if S % st:
            continue
        if st != S and st % 8:
            continue
        if fallback is None:
            fallback = st                                         # largest legal divisor
        h_bytes = 2 * Bt * st * E * h_itemsize                    # double-buffered h tile
        m_bytes = 2 * Bt * _round_up(st, 8) * 128 * mask_itemsize # lane-padded mask tile
        if h_bytes + m_bytes <= budget_bytes:
            return st
    return fallback if fallback is not None else S


def anomaly_detector_forward(last_hidden_state, attention_mask, w1, b1, w2, b2,
                             *, batch_tile=None, seq_tile=None,
                             stream_dtype=jnp.bfloat16):
    B, S, E = last_hidden_state.shape
    H = w1.shape[1]
    C = w2.shape[1]
    assert attention_mask.shape == (B, S)
    assert w1.shape == (E, H) and b1.shape == (H,)
    assert w2.shape == (H, C) and b2.shape == (C,)

    # --- bandwidth: stream hidden state at bf16 (kernel still accumulates in f32) ---
    if stream_dtype is not None and last_hidden_state.dtype != stream_dtype:
        last_hidden_state = last_hidden_state.astype(stream_dtype)
    # Mask as (B, S, 1) so its block keeps a legal (sublane, lane) shape; bf16 keeps
    # 0/1 exact and halves the lane-padded mask DMA bytes vs int32/f32.
    mask3 = attention_mask.reshape(B, S, 1).astype(jnp.bfloat16)
    b1_2d = b1.reshape(1, H)      # lane-dense bias layout
    b2_2d = b2.reshape(1, C)

    # --- batch tile: give the 'parallel' grid axis >= 2 steps when B allows it so
    # multi-TensorCore chips (v7x) can shard the batch; v5e/v6e are unaffected. ---
    if batch_tile is not None:
        Bt = batch_tile
    elif B % 16 == 0:             # B//2 stays a multiple of 8 (output-block constraint)
        Bt = B // 2
    else:
        Bt = B
    assert B % Bt == 0

    # --- generation-aware VMEM budget ---
    try:
        vmem_cap = int(pltpu.get_tpu_info().vmem_capacity_bytes)
    except Exception:
        vmem_cap = 64 * 1024 * 1024                 # conservative (v7x per-core VMEM)
    vmem_limit = (vmem_cap * 3) // 4                # ~96 MiB on v5e/v6e, ~48 MiB on v7x

    f32 = 4
    resident_bytes = (E * H + H + H * C + C) * f32                      # weights/biases (single-buffered)
    scratch_bytes = (Bt * max(E, 128) + _round_up(Bt, 8) * 128) * f32   # f32 accumulators (lane-padded)
    out_bytes = 2 * _round_up(Bt, 8) * 128 * f32                        # (Bt, C) out block, 2 buffers
    headroom = 2 * 1024 * 1024                                          # Mosaic internal scratch etc.
    stream_budget = max(
        vmem_limit - resident_bytes - scratch_bytes - out_bytes - headroom, 1 << 20)

    h_item = jnp.dtype(last_hidden_state.dtype).itemsize
    m_item = jnp.dtype(mask3.dtype).itemsize
    St = seq_tile if seq_tile is not None else _pick_seq_tile(
        S, Bt, E, h_item, m_item, stream_budget)
    assert S % St == 0 and (St == S or St % 8 == 0)

    grid = (B // Bt, S // St)
    compiler_params = pltpu.CompilerParams(
        dimension_semantics=("parallel", "arbitrary"),
        vmem_limit_bytes=vmem_limit)

    def build(single_buffer_weights):
        wkw = dict(pipeline_mode=pl.Buffered(1)) if single_buffer_weights else {}
        in_specs = [
            pl.BlockSpec((Bt, St, E), lambda b, s: (b, s, 0)),     # streamed hidden-state tile
            pl.BlockSpec((Bt, St, 1), lambda b, s: (b, s, 0)),     # streamed mask tile
            pl.BlockSpec((E, H), lambda b, s: (0, 0), **wkw),      # resident weights / biases
            pl.BlockSpec((1, H), lambda b, s: (0, 0), **wkw),
            pl.BlockSpec((H, C), lambda b, s: (0, 0), **wkw),
            pl.BlockSpec((1, C), lambda b, s: (0, 0), **wkw),
        ]
        return pl.pallas_call(
            anomaly_head_kernel,
            out_shape=jax.ShapeDtypeStruct((B, C), jnp.float32),
            grid_spec=pltpu.PrefetchScalarGridSpec(
                num_scalar_prefetch=0,
                grid=grid,
                in_specs=in_specs,
                out_specs=pl.BlockSpec((Bt, C), lambda b, s: (b, 0)),  # resident over S axis
                scratch_shapes=[
                    pltpu.VMEM((Bt, E), jnp.float32),   # masked-sum accumulator
                    pltpu.VMEM((Bt, 1), jnp.float32),   # token-count accumulator
                ],
            ),
            compiler_params=compiler_params,
        )

    args = (last_hidden_state, mask3, w1, b1_2d, w2, b2_2d)
    try:
        return build(True)(*args)
    except Exception:
        # pl.Buffered(1) on the resident operands is a VMEM-only micro-opt; fall back
        # to default double-buffering if this Pallas build rejects it.
        return build(False)(*args)


def _reference(last_hidden_state, attention_mask, w1, b1, w2, b2):
    h = last_hidden_state.astype(jnp.float32)
    m = attention_mask.astype(jnp.float32)[:, :, None]
    summed = jnp.sum(h * m, axis=1)
    counts = jnp.maximum(jnp.sum(m, axis=1), 1e-9)
    pooled = summed / counts
    hdn = jnp.maximum(pooled @ w1 + b1, 0.0)
    return hdn @ w2 + b2


if __name__ == "__main__":
    # Small shapes consistent with the module: batch=2, seq=32, embedding_dim=32,
    # hidden_dim=128 (module default), num_class=4.  seq_tile=16 forces a 2-step
    # sequence reduction (and is bf16-sublane native) so the scratch-accumulator
    # path is exercised.
    B, S, E, H, C = 2, 32, 32, 128, 4

    key = jax.random.PRNGKey(0)
    k_h, k_w1, k_b1, k_w2, k_b2 = jax.random.split(key, 5)

    last_hidden_state = jax.random.normal(k_h, (B, S, E), dtype=jnp.float32)
    # attention mask: 1s with trailing padding zeros (int32, like HF tokenizer output)
    lengths = jnp.array([S, S - 5], dtype=jnp.int32)
    attention_mask = (jnp.arange(S)[None, :] < lengths[:, None]).astype(jnp.int32)

    # Deterministic parameter init (torch.nn.Linear-style uniform bounds).
    w1 = jax.random.uniform(k_w1, (E, H), jnp.float32, -1.0 / (E ** 0.5), 1.0 / (E ** 0.5))
    b1 = jax.random.uniform(k_b1, (H,), jnp.float32, -1.0 / (E ** 0.5), 1.0 / (E ** 0.5))
    w2 = jax.random.uniform(k_w2, (H, C), jnp.float32, -1.0 / (H ** 0.5), 1.0 / (H ** 0.5))
    b2 = jax.random.uniform(k_b2, (C,), jnp.float32, -1.0 / (H ** 0.5), 1.0 / (H ** 0.5))

    logits = anomaly_detector_forward(last_hidden_state, attention_mask,
                                      w1, b1, w2, b2, seq_tile=16)
    jax.block_until_ready(logits)

    # Reference on the same bf16-streamed hidden state (apples-to-apples with the
    # kernel's streaming dtype; both accumulate in f32).
    ref = _reference(last_hidden_state.astype(jnp.bfloat16), attention_mask,
                     w1, b1, w2, b2)
    assert logits.shape == (B, C)
    assert jnp.allclose(logits, ref, atol=2e-2, rtol=2e-2), (logits, ref)

    print("KERNEL_OK")
</pallas_src>

<mosaic_0001>
module attributes {stable_mosaic.version = 11 : i64} {
  func.func @anomaly_head_kernel(%arg0: i32, %arg1: i32, %arg2: memref<2x16x32xbf16, #tpu.memory_space<vmem>>, %arg3: memref<2x16x1xbf16, #tpu.memory_space<vmem>>, %arg4: memref<32x128xf32, #tpu.memory_space<vmem>>, %arg5: memref<1x128xf32, #tpu.memory_space<vmem>>, %arg6: memref<128x4xf32, #tpu.memory_space<vmem>>, %arg7: memref<1x4xf32, #tpu.memory_space<vmem>>, %arg8: memref<2x4xf32, #tpu.memory_space<vmem>>, %arg9: memref<2x32xf32, #tpu.memory_space<vmem>>, %arg10: memref<2x1xf32, #tpu.memory_space<vmem>>) attributes {dimension_semantics = [#tpu.dimension_semantics<parallel>, #tpu.dimension_semantics<arbitrary>], iteration_bounds = array<i64: 1, 2>, scalar_prefetch = 0 : i64, scratch_operands = 2 : i64, tpu.core_type = #tpu.core_type<tc>, window_params = [{transform_indices = @transform_0, window_bounds = array<i64: 2, 16, 32>}, {transform_indices = @transform_1, window_bounds = array<i64: 2, 16, 1>}, {pipeline_mode = #tpu.pipeline_mode<synchronous>, transform_indices = @transform_2, window_bounds = array<i64: 32, 128>}, {pipeline_mode = #tpu.pipeline_mode<synchronous>, transform_indices = @transform_3, window_bounds = array<i64: 1, 128>}, {pipeline_mode = #tpu.pipeline_mode<synchronous>, transform_indices = @transform_4, window_bounds = array<i64: 128, 4>}, {pipeline_mode = #tpu.pipeline_mode<synchronous>, transform_indices = @transform_5, window_bounds = array<i64: 1, 4>}, {transform_indices = @transform_6, window_bounds = array<i64: 2, 4>}]} {
    %c0_i32 = arith.constant 0 : i32
    %0 = arith.cmpi eq, %arg1, %c0_i32 : i32
    %1 = arith.extui %0 : i1 to i32
    %c0_i32_0 = arith.constant 0 : i32
    %2 = arith.cmpi ne, %1, %c0_i32_0 : i32
    scf.if %2 {
      %cst_16 = arith.constant 0.000000e+00 : f32
      %20 = vector.broadcast %cst_16 : f32 to vector<2x32xf32>
      %c0_17 = arith.constant 0 : index
      %c0_18 = arith.constant 0 : index
      %21 = vector.load %arg9[%c0_17, %c0_18] : memref<2x32xf32, #tpu.memory_space<vmem>>, vector<2x32xf32>
      tpu.vector_store %arg9[%c0_17, %c0_18], %20 {strides = array<i32>} : memref<2x32xf32, #tpu.memory_space<vmem>>, vector<2x32xf32>,
      %cst_19 = arith.constant 0.000000e+00 : f32
      %22 = vector.broadcast %cst_19 : f32 to vector<2x1xf32>
      %c0_20 = arith.constant 0 : index
      %c0_21 = arith.constant 0 : index
      %23 = vector.load %arg10[%c0_20, %c0_21] : memref<2x1xf32, #tpu.memory_space<vmem>>, vector<2x1xf32>
      tpu.vector_store %arg10[%c0_20, %c0_21], %22 {strides = array<i32>} : memref<2x1xf32, #tpu.memory_space<vmem>>, vector<2x1xf32>,
    } else {
    }
    %c0 = arith.constant 0 : index
    %c0_1 = arith.constant 0 : index
    %c0_2 = arith.constant 0 : index
    %3 = vector.load %arg2[%c0, %c0_1, %c0_2] : memref<2x16x32xbf16, #tpu.memory_space<vmem>>, vector<2x16x32xbf16>
    %4 = arith.extf %3 : vector<2x16x32xbf16> to vector<2x16x32xf32>
    %c0_3 = arith.constant 0 : index
    %c0_4 = arith.constant 0 : index
    %c0_5 = arith.constant 0 : index
    %5 = vector.load %arg3[%c0_3, %c0_4, %c0_5] : memref<2x16x1xbf16, #tpu.memory_space<vmem>>, vector<2x16x1xbf16>
    %6 = arith.extf %5 : vector<2x16x1xbf16> to vector<2x16x1xf32>
    %c0_6 = arith.constant 0 : index
    %c0_7 = arith.constant 0 : index
    %7 = vector.load %arg9[%c0_6, %c0_7] : memref<2x32xf32, #tpu.memory_space<vmem>>, vector<2x32xf32>
    %8 = vector.broadcast %6 : vector<2x16x1xf32> to vector<2x16x32xf32>
    %9 = arith.mulf %4, %8 : vector<2x16x32xf32>
    %cst = arith.constant dense<0.000000e+00> : vector<2x32xf32>
    %10 = vector.multi_reduction <add>, %9, %cst [1] : vector<2x16x32xf32> to vector<2x32xf32>
    %11 = arith.addf %7, %10 : vector<2x32xf32>
    %c0_8 = arith.constant 0 : index
    %c0_9 = arith.constant 0 : index
    %12 = vector.load %arg9[%c0_8, %c0_9] : memref<2x32xf32, #tpu.memory_space<vmem>>, vector<2x32xf32>
    tpu.vector_store %arg9[%c0_8, %c0_9], %11 {strides = array<i32>} : memref<2x32xf32, #tpu.memory_space<vmem>>, vector<2x32xf32>,
    %c0_10 = arith.constant 0 : index
    %c0_11 = arith.constant 0 : index
    %13 = vector.load %arg10[%c0_10, %c0_11] : memref<2x1xf32, #tpu.memory_space<vmem>>, vector<2x1xf32>
    %cst_12 = arith.constant dense<0.000000e+00> : vector<2x1xf32>
    %14 = vector.multi_reduction <add>, %6, %cst_12 [1] : vector<2x16x1xf32> to vector<2x1xf32>
    %15 = arith.addf %13, %14 : vector<2x1xf32>
    %c0_13 = arith.constant 0 : index
    %c0_14 = arith.constant 0 : index
    %16 = vector.load %arg10[%c0_13, %c0_14] : memref<2x1xf32, #tpu.memory_space<vmem>>, vector<2x1xf32>
    tpu.vector_store %arg10[%c0_13, %c0_14], %15 {strides = array<i32>} : memref<2x1xf32, #tpu.memory_space<vmem>>, vector<2x1xf32>,
    %c1_i32 = arith.constant 1 : i32
    %17 = arith.cmpi eq, %arg1, %c1_i32 : i32
    %18 = arith.extui %17 : i1 to i32
    %c0_i32_15 = arith.constant 0 : i32
    %19 = arith.cmpi ne, %18, %c0_i32_15 : i32
    scf.if %19 {
      %c0_16 = arith.constant 0 : index
      %c0_17 = arith.constant 0 : index
      %20 = vector.load %arg10[%c0_16, %c0_17] : memref<2x1xf32, #tpu.memory_space<vmem>>, vector<2x1xf32>
      %cst_18 = arith.constant 9.99999971E-10 : f32
      %21 = vector.broadcast %cst_18 : f32 to vector<2x1xf32>
      %22 = arith.maximumf %20, %21 : vector<2x1xf32>
      %c0_19 = arith.constant 0 : index
      %c0_20 = arith.constant 0 : index
      %23 = vector.load %arg9[%c0_19, %c0_20] : memref<2x32xf32, #tpu.memory_space<vmem>>, vector<2x32xf32>
      %24 = tpu.reciprocal %22 : vector<2x1xf32> -> vector<2x1xf32>
      %25 = vector.broadcast %24 : vector<2x1xf32> to vector<2x32xf32>
      %26 = arith.mulf %23, %25 : vector<2x32xf32>
      %c0_21 = arith.constant 0 : index
      %c0_22 = arith.constant 0 : index
      %27 = vector.load %arg4[%c0_21, %c0_22] : memref<32x128xf32, #tpu.memory_space<vmem>>, vector<32x128xf32>
      %cst_23 = arith.constant dense<0.000000e+00> : vector<2x128xf32>
      %28 = tpu.matmul %26, %27, %cst_23 {dimension_numbers = #tpu.dot_dimension_numbers<[1], [0], [0], [1], [0, 0, 1, 1], [], []>} : vector<2x32xf32>, vector<32x128xf32>, vector<2x128xf32> -> vector<2x128xf32>
      %c0_24 = arith.constant 0 : index
      %c0_25 = arith.constant 0 : index
      %29 = vector.load %arg5[%c0_24, %c0_25] : memref<1x128xf32, #tpu.memory_space<vmem>>, vector<1x128xf32>
      %30 = vector.broadcast %29 : vector<1x128xf32> to vector<2x128xf32>
      %31 = arith.addf %28, %30 : vector<2x128xf32>
      %cst_26 = arith.constant 0.000000e+00 : f32
      %32 = vector.broadcast %cst_26 : f32 to vector<2x128xf32>
      %33 = arith.maximumf %31, %32 : vector<2x128xf32>
      %c0_27 = arith.constant 0 : index
      %c0_28 = arith.constant 0 : index
      %34 = vector.load %arg6[%c0_27, %c0_28] : memref<128x4xf32, #tpu.memory_space<vmem>>, vector<128x4xf32>
      %cst_29 = arith.constant dense<0.000000e+00> : vector<2x4xf32>
      %35 = tpu.matmul %33, %34, %cst_29 {dimension_numbers = #tpu.dot_dimension_numbers<[1], [0], [0], [1], [0, 0, 1, 1], [], []>} : vector<2x128xf32>, vector<128x4xf32>, vector<2x4xf32> -> vector<2x4xf32>
      %c0_30 = arith.constant 0 : index
      %c0_31 = arith.constant 0 : index
      %36 = vector.load %arg7[%c0_30, %c0_31] : memref<1x4xf32, #tpu.memory_space<vmem>>, vector<1x4xf32>
      %37 = vector.broadcast %36 : vector<1x4xf32> to vector<2x4xf32>
      %38 = arith.addf %35, %37 : vector<2x4xf32>
      %c0_32 = arith.constant 0 : index
      %c0_33 = arith.constant 0 : index
      %39 = vector.load %arg8[%c0_32, %c0_33] : memref<2x4xf32, #tpu.memory_space<vmem>>, vector<2x4xf32>
      tpu.vector_store %arg8[%c0_32, %c0_33], %38 {strides = array<i32>} : memref<2x4xf32, #tpu.memory_space<vmem>>, vector<2x4xf32>,
    } else {
    }
    return
  }
  func.func @transform_0(%arg0: i32, %arg1: i32) -> (i32, i32, i32) {
    %c0_i32 = arith.constant 0 : i32
    %c0_i32_0 = arith.constant 0 : i32
    return %arg0, %arg1, %c0_i32 : i32, i32, i32
  }
  func.func @transform_1(%arg0: i32, %arg1: i32) -> (i32, i32, i32) {
    %c0_i32 = arith.constant 0 : i32
    %c0_i32_0 = arith.constant 0 : i32
    return %arg0, %arg1, %c0_i32 : i32, i32, i32
  }
  func.func @transform_2(%arg0: i32, %arg1: i32) -> (i32, i32) {
    %c0_i32 = arith.constant 0 : i32
    %c0_i32_0 = arith.constant 0 : i32
    %c0_i32_1 = arith.constant 0 : i32
    return %c0_i32, %c0_i32_0 : i32, i32
  }
  func.func @transform_3(%arg0: i32, %arg1: i32) -> (i32, i32) {
    %c0_i32 = arith.constant 0 : i32
    %c0_i32_0 = arith.constant 0 : i32
    %c0_i32_1 = arith.constant 0 : i32
    return %c0_i32, %c0_i32_0 : i32, i32
  }
  func.func @transform_4(%arg0: i32, %arg1: i32) -> (i32, i32) {
    %c0_i32 = arith.constant 0 : i32
    %c0_i32_0 = arith.constant 0 : i32
    %c0_i32_1 = arith.constant 0 : i32
    return %c0_i32, %c0_i32_0 : i32, i32
  }
  func.func @transform_5(%arg0: i32, %arg1: i32) -> (i32, i32) {
    %c0_i32 = arith.constant 0 : i32
    %c0_i32_0 = arith.constant 0 : i32
    %c0_i32_1 = arith.constant 0 : i32
    return %c0_i32, %c0_i32_0 : i32, i32
  }
  func.func @transform_6(%arg0: i32, %arg1: i32) -> (i32, i32) {
    %c0_i32 = arith.constant 0 : i32
    %c0_i32_0 = arith.constant 0 : i32
    return %arg0, %c0_i32 : i32, i32
  }
}

module attributes {stable_mosaic.version = 11 : i64} {
  func.func @anomaly_head_kernel(%arg0: i32, %arg1: i32, %arg2: memref<2x16x32xbf16, #tpu.memory_space<vmem>>, %arg3: memref<2x16x1xbf16, #tpu.memory_space<vmem>>, %arg4: memref<32x128xf32, #tpu.memory_space<vmem>>, %arg5: memref<1x128xf32, #tpu.memory_space<vmem>>, %arg6: memref<128x4xf32, #tpu.memory_space<vmem>>, %arg7: memref<1x4xf32, #tpu.memory_space<vmem>>, %arg8: memref<2x4xf32, #tpu.memory_space<vmem>>, %arg9: memref<2x32xf32, #tpu.memory_space<vmem>>, %arg10: memref<2x1xf32, #tpu.memory_space<vmem>>) attributes {dimension_semantics = [#tpu.dimension_semantics<parallel>, #tpu.dimension_semantics<arbitrary>], iteration_bounds = array<i64: 1, 2>, scalar_prefetch = 0 : i64, scratch_operands = 2 : i64, tpu.core_type = #tpu.core_type<tc>, window_params = [{transform_indices = @transform_0, window_bounds = array<i64: 2, 16, 32>}, {transform_indices = @transform_1, window_bounds = array<i64: 2, 16, 1>}, {pipeline_mode = #tpu.pipeline_mode<synchronous>, transform_indices = @transform_2, window_bounds = array<i64: 32, 128>}, {pipeline_mode = #tpu.pipeline_mode<synchronous>, transform_indices = @transform_3, window_bounds = array<i64: 1, 128>}, {pipeline_mode = #tpu.pipeline_mode<synchronous>, transform_indices = @transform_4, window_bounds = array<i64: 128, 4>}, {pipeline_mode = #tpu.pipeline_mode<synchronous>, transform_indices = @transform_5, window_bounds = array<i64: 1, 4>}, {transform_indices = @transform_6, window_bounds = array<i64: 2, 4>}]} {
    %c0_i32 = arith.constant 0 : i32
    %0 = arith.cmpi eq, %arg1, %c0_i32 : i32
    %1 = arith.extui %0 : i1 to i32
    %c0_i32_0 = arith.constant 0 : i32
    %2 = arith.cmpi ne, %1, %c0_i32_0 : i32
    scf.if %2 {
      %cst_16 = arith.constant 0.000000e+00 : f32
      %20 = vector.broadcast %cst_16 : f32 to vector<2x32xf32>
      %c0_17 = arith.constant 0 : index
      %c0_18 = arith.constant 0 : index
      %21 = vector.load %arg9[%c0_17, %c0_18] : memref<2x32xf32, #tpu.memory_space<vmem>>, vector<2x32xf32>
      tpu.vector_store %arg9[%c0_17, %c0_18], %20 {strides = array<i32>} : memref<2x32xf32, #tpu.memory_space<vmem>>, vector<2x32xf32>,
      %cst_19 = arith.constant 0.000000e+00 : f32
      %22 = vector.broadcast %cst_19 : f32 to vector<2x1xf32>
      %c0_20 = arith.constant 0 : index
      %c0_21 = arith.constant 0 : index
      %23 = vector.load %arg10[%c0_20, %c0_21] : memref<2x1xf32, #tpu.memory_space<vmem>>, vector<2x1xf32>
      tpu.vector_store %arg10[%c0_20, %c0_21], %22 {strides = array<i32>} : memref<2x1xf32, #tpu.memory_space<vmem>>, vector<2x1xf32>,
    } else {
    }
    %c0 = arith.constant 0 : index
    %c0_1 = arith.constant 0 : index
    %c0_2 = arith.constant 0 : index
    %3 = vector.load %arg2[%c0, %c0_1, %c0_2] : memref<2x16x32xbf16, #tpu.memory_space<vmem>>, vector<2x16x32xbf16>
    %4 = arith.extf %3 : vector<2x16x32xbf16> to vector<2x16x32xf32>
    %c0_3 = arith.constant 0 : index
    %c0_4 = arith.constant 0 : index
    %c0_5 = arith.constant 0 : index
    %5 = vector.load %arg3[%c0_3, %c0_4, %c0_5] : memref<2x16x1xbf16, #tpu.memory_space<vmem>>, vector<2x16x1xbf16>
    %6 = arith.extf %5 : vector<2x16x1xbf16> to vector<2x16x1xf32>
    %c0_6 = arith.constant 0 : index
    %c0_7 = arith.constant 0 : index
    %7 = vector.load %arg9[%c0_6, %c0_7] : memref<2x32xf32, #tpu.memory_space<vmem>>, vector<2x32xf32>
    %8 = vector.broadcast %6 : vector<2x16x1xf32> to vector<2x16x32xf32>
    %9 = arith.mulf %4, %8 : vector<2x16x32xf32>
    %cst = arith.constant dense<0.000000e+00> : vector<2x32xf32>
    %10 = vector.multi_reduction <add>, %9, %cst [1] : vector<2x16x32xf32> to vector<2x32xf32>
    %11 = arith.addf %7, %10 : vector<2x32xf32>
    %c0_8 = arith.constant 0 : index
    %c0_9 = arith.constant 0 : index
    %12 = vector.load %arg9[%c0_8, %c0_9] : memref<2x32xf32, #tpu.memory_space<vmem>>, vector<2x32xf32>
    tpu.vector_store %arg9[%c0_8, %c0_9], %11 {strides = array<i32>} : memref<2x32xf32, #tpu.memory_space<vmem>>, vector<2x32xf32>,
    %c0_10 = arith.constant 0 : index
    %c0_11 = arith.constant 0 : index
    %13 = vector.load %arg10[%c0_10, %c0_11] : memref<2x1xf32, #tpu.memory_space<vmem>>, vector<2x1xf32>
    %cst_12 = arith.constant dense<0.000000e+00> : vector<2x1xf32>
    %14 = vector.multi_reduction <add>, %6, %cst_12 [1] : vector<2x16x1xf32> to vector<2x1xf32>
    %15 = arith.addf %13, %14 : vector<2x1xf32>
    %c0_13 = arith.constant 0 : index
    %c0_14 = arith.constant 0 : index
    %16 = vector.load %arg10[%c0_13, %c0_14] : memref<2x1xf32, #tpu.memory_space<vmem>>, vector<2x1xf32>
    tpu.vector_store %arg10[%c0_13, %c0_14], %15 {strides = array<i32>} : memref<2x1xf32, #tpu.memory_space<vmem>>, vector<2x1xf32>,
    %c1_i32 = arith.constant 1 : i32
    %17 = arith.cmpi eq, %arg1, %c1_i32 : i32
    %18 = arith.extui %17 : i1 to i32
    %c0_i32_15 = arith.constant 0 : i32
    %19 = arith.cmpi ne, %18, %c0_i32_15 : i32
    scf.if %19 {
      %c0_16 = arith.constant 0 : index
      %c0_17 = arith.constant 0 : index
      %20 = vector.load %arg10[%c0_16, %c0_17] : memref<2x1xf32, #tpu.memory_space<vmem>>, vector<2x1xf32>
      %cst_18 = arith.constant 9.99999971E-10 : f32
      %21 = vector.broadcast %cst_18 : f32 to vector<2x1xf32>
      %22 = arith.maximumf %20, %21 : vector<2x1xf32>
      %c0_19 = arith.constant 0 : index
      %c0_20 = arith.constant 0 : index
      %23 = vector.load %arg9[%c0_19, %c0_20] : memref<2x32xf32, #tpu.memory_space<vmem>>, vector<2x32xf32>
      %24 = tpu.reciprocal %22 : vector<2x1xf32> -> vector<2x1xf32>
      %25 = vector.broadcast %24 : vector<2x1xf32> to vector<2x32xf32>
      %26 = arith.mulf %23, %25 : vector<2x32xf32>
      %c0_21 = arith.constant 0 : index
      %c0_22 = arith.constant 0 : index
      %27 = vector.load %arg4[%c0_21, %c0_22] : memref<32x128xf32, #tpu.memory_space<vmem>>, vector<32x128xf32>
      %cst_23 = arith.constant dense<0.000000e+00> : vector<2x128xf32>
      %28 = tpu.matmul %26, %27, %cst_23 {dimension_numbers = #tpu.dot_dimension_numbers<[1], [0], [0], [1], [0, 0, 1, 1], [], []>} : vector<2x32xf32>, vector<32x128xf32>, vector<2x128xf32> -> vector<2x128xf32>
      %c0_24 = arith.constant 0 : index
      %c0_25 = arith.constant 0 : index
      %29 = vector.load %arg5[%c0_24, %c0_25] : memref<1x128xf32, #tpu.memory_space<vmem>>, vector<1x128xf32>
      %30 = vector.broadcast %29 : vector<1x128xf32> to vector<2x128xf32>
      %31 = arith.addf %28, %30 : vector<2x128xf32>
      %cst_26 = arith.constant 0.000000e+00 : f32
      %32 = vector.broadcast %cst_26 : f32 to vector<2x128xf32>
      %33 = arith.maximumf %31, %32 : vector<2x128xf32>
      %c0_27 = arith.constant 0 : index
      %c0_28 = arith.constant 0 : index
      %34 = vector.load %arg6[%c0_27, %c0_28] : memref<128x4xf32, #tpu.memory_space<vmem>>, vector<128x4xf32>
      %cst_29 = arith.constant dense<0.000000e+00> : vector<2x4xf32>
      %35 = tpu.matmul %33, %34, %cst_29 {dimension_numbers = #tpu.dot_dimension_numbers<[1], [0], [0], [1], [0, 0, 1, 1], [], []>} : vector<2x128xf32>, vector<128x4xf32>, vector<2x4xf32> -> vector<2x4xf32>
      %c0_30 = arith.constant 0 : index
      %c0_31 = arith.constant 0 : index
      %36 = vector.load %arg7[%c0_30, %c0_31] : memref<1x4xf32, #tpu.memory_space<vmem>>, vector<1x4xf32>
      %37 = vector.broadcast %36 : vector<1x4xf32> to vector<2x4xf32>
      %38 = arith.addf %35, %37 : vector<2x4xf32>
      %c0_32 = arith.constant 0 : index
      %c0_33 = arith.constant 0 : index
      %39 = vector.load %arg8[%c0_32, %c0_33] : memref<2x4xf32, #tpu.memory_space<vmem>>, vector<2x4xf32>
      tpu.vector_store %arg8[%c0_32, %c0_33], %38 {strides = array<i32>} : memref<2x4xf32, #tpu.memory_space<vmem>>, vector<2x4xf32>,
    } else {
    }
    return
  }
  func.func @transform_0(%arg0: i32, %arg1: i32) -> (i32, i32, i32) {
    %c0_i32 = arith.constant 0 : i32
    %c0_i32_0 = arith.constant 0 : i32
    return %arg0, %arg1, %c0_i32 : i32, i32, i32
  }
  func.func @transform_1(%arg0: i32, %arg1: i32) -> (i32, i32, i32) {
    %c0_i32 = arith.constant 0 : i32
    %c0_i32_0 = arith.constant 0 : i32
    return %arg0, %arg1, %c0_i32 : i32, i32, i32
  }
  func.func @transform_2(%arg0: i32, %arg1: i32) -> (i32, i32) {
    %c0_i32 = arith.constant 0 : i32
    %c0_i32_0 = arith.constant 0 : i32
    %c0_i32_1 = arith.constant 0 : i32
    return %c0_i32, %c0_i32_0 : i32, i32
  }
  func.func @transform_3(%arg0: i32, %arg1: i32) -> (i32, i32) {
    %c0_i32 = arith.constant 0 : i32
    %c0_i32_0 = arith.constant 0 : i32
    %c0_i32_1 = arith.constant 0 : i32
    return %c0_i32, %c0_i32_0 : i32, i32
  }
  func.func @transform_4(%arg0: i32, %arg1: i32) -> (i32, i32) {
    %c0_i32 = arith.constant 0 : i32
    %c0_i32_0 = arith.constant 0 : i32
    %c0_i32_1 = arith.constant 0 : i32
    return %c0_i32, %c0_i32_0 : i32, i32
  }
  func.func @transform_5(%arg0: i32, %arg1: i32) -> (i32, i32) {
    %c0_i32 = arith.constant 0 : i32
    %c0_i32_0 = arith.constant 0 : i32
    %c0_i32_1 = arith.constant 0 : i32
    return %c0_i32, %c0_i32_0 : i32, i32
  }
  func.func @transform_6(%arg0: i32, %arg1: i32) -> (i32, i32) {
    %c0_i32 = arith.constant 0 : i32
    %c0_i32_0 = arith.constant 0 : i32
    return %arg0, %c0_i32 : i32, i32
  }
}

</mosaic_0001>

<llo_original>
// kernel: tpu_custom_call.1
$region0: #{tpu_custom_call.1}
  #allocation0 [shape = 'u32[]', space=smem, size = 0x4, offset = 0x4, fixed_abs, tag = 'smem constant byte address 0x4 - core index']
  #allocation1 [shape = 'u32[144,128]{1,0:T(1,128)}', space=vmem, size = 0x12000, scoped, tag = 'internal scratch']
  #allocation2 [shape = 'f32[2,32]{1,0:T(2,128)}', space=vmem, size = 0x400, scoped, tag = 'scratch operand']
  #allocation3 [shape = 'f32[2,1]{1,0:T(2,128)}', space=vmem, size = 0x400, scoped, tag = 'scratch operand']
  %s0 = inlined_call_operand.vmem [shape: bf16[2,32,32], index: 0, kind: input, shape index: {}]
  %s1 = inlined_call_operand.vmem [shape: bf16[2,32,1], index: 1, kind: input, shape index: {}]
  %s2 = inlined_call_operand.vmem [shape: f32[32,128], index: 2, kind: input, shape index: {}]
  %s3 = inlined_call_operand.vmem [shape: f32[1,128], index: 3, kind: input, shape index: {}]
  %s4 = inlined_call_operand.vmem [shape: f32[128,4], index: 4, kind: input, shape index: {}]
  %s5 = inlined_call_operand.vmem [shape: f32[1,4], index: 5, kind: input, shape index: {}]
  %s6 = inlined_call_operand.hbm [shape: f32[2,4], index: 6, kind: output, shape index: {}]
  %s7 = sld [smem:[#allocation0]]
  $region147: #{tpu_custom_call.1} parent=0
    _
  %s9 = ssub.s32 1, %s7
  %s10 = scalar_select 0, %s9, %s7
  $region1: #{tpu_custom_call.1} parent=0
    #allocation4 [shape = 'u8[16384]{0}', space=vmem, size = 0x4000, scoped, tag = 'input window, operand 0']
    #allocation5 [shape = 'u8[16384]{0}', space=vmem, size = 0x4000, scoped, tag = 'input window, operand 1']
    #allocation6 [shape = 'u8[1024]{0}', space=vmem, size = 0x400, scoped, tag = 'output window, operand 0, single buffered']
    #allocation7 [shape = 's32[2]{0}', space=sflag, size = 0x8, scoped, tag = 'scoped memory for tpu_custom_call.1']
    %11 = vsyncpa [#allocation7], 0
    loop: start=0, step=1, limit=4
    $region2: #{tpu_custom_call.1} parent=1 // loop_pre_header
      _
    $region3: #{tpu_custom_call.1} parent=1 // loop_header
      %s13 = sphi 0, %s17
      %p14 = scmp.ge.s32.totalorder %s13, 4
      %s20 = sphi 0, %s32
      %s21 = sphi 0, %s28
      %s22 = sphi 0, %s20
      %s23 = sphi 0, %s21
      %s24 = sphi 0, %s22
      %s25 = sphi 0, %s23
      %s37 = sphi 0, %s39
      %s40 = sphi 0, %s37
      %s41 = sphi 0, %s40
      %s57 = sphi 0, %s41
      %s65 = sphi 0, %s67
      %s68 = sphi 0, %s65
      %s69 = sphi 0, %s68
      %s85 = sphi 0, %s69
      %s89 = sphi 0, %s89
      %s91 = sphi 0, %s89
      %s92 = sphi 0, %s91
      %s106 = sphi 0, %s92
      %s110 = sphi 0, %s110
      %s112 = sphi 0, %s110
      %s113 = sphi 0, %s112
      %s127 = sphi 0, %s113
      %s131 = sphi 0, %s131
      %s133 = sphi 0, %s131
      %s134 = sphi 0, %s133
      %s148 = sphi 0, %s134
      %s152 = sphi 0, %s152
      %s154 = sphi 0, %s152
      %s155 = sphi 0, %s154
      %s169 = sphi 0, %s155
      %s175 = sphi 0, %s177
      %s178 = sphi 0, %s175
      %s179 = sphi 0, %s178
      %s195 = sphi 0, %s179
    $region4: #{tpu_custom_call.1} parent=1 // loop_header_branch
      %16 = sbr.rel (%p14) target = $region8
    $region5: #{tpu_custom_call.1} parent=1 // loop_body
      %s18 = ssub.s32 %s13, 1
      %s19 = ssub.s32 %s13, 2
      %s26 = sadd.s32 1, %s21
      %p27 = scmp.ge.s32.totalorder %s26, 2
      %s28 = scalar_select %p27, 0, %s26
      %s29 = sadd.s32 1, %s20
      %s30 = scalar_select %p27, %s29, %s20
      %p31 = scmp.ge.s32.totalorder %s30, 1
      %s32 = scalar_select %p31, 0, %s30
      %s33 = ssub.s32 %s20, %s32
      %s34 = ssub.s32 %s21, %s28
      %s35 = sor.u32 %s33, %s34
      %p36 = scmp.eq.s32.totalorder %s35, 0
      %s38 = sadd.s32 %s37, 1
      %s39 = scalar_select %p36, %s37, %s38
      %p42 = pneg %p36
      %p43 = scmp.eq.s32.totalorder %s13, 1
      %p44 = por %p42, %p43
      %p45 = scmp.ne.s32.totalorder %s37, %s40
      %p46 = scmp.eq.s32.totalorder %s13, 0
      %p47 = por %p45, %p46
      %p48 = scmp.ne.s32.totalorder %s37, %s40
      %p49 = scmp.eq.s32.totalorder %s18, 1
      %p50 = por %p48, %p49
      %p51 = scmp.ne.s32.totalorder %s40, %s41
      %p52 = scmp.eq.s32.totalorder %s18, 0
      %p53 = por %p51, %p52
      %p54 = scmp.ne.s32.totalorder %s40, %s41
      %p55 = scmp.eq.s32.totalorder %s19, 1
      %p56 = por %p54, %p55
      %p58 = scmp.ne.s32.totalorder %s41, %s57
      %p59 = scmp.eq.s32.totalorder %s19, 0
      %p60 = por %p58, %p59
      %s61 = ssub.s32 %s20, %s32
      %s62 = ssub.s32 %s21, %s28
      %s63 = sor.u32 %s61, %s62
      %p64 = scmp.eq.s32.totalorder %s63, 0
      %s66 = sadd.s32 %s65, 1
      %s67 = scalar_select %p64, %s65, %s66
      %p70 = pneg %p64
      %p71 = scmp.eq.s32.totalorder %s13, 1
      %p72 = por %p70, %p71
      %p73 = scmp.ne.s32.totalorder %s65, %s68
      %p74 = scmp.eq.s32.totalorder %s13, 0
      %p75 = por %p73, %p74
      %p76 = scmp.ne.s32.totalorder %s65, %s68
      %p77 = scmp.eq.s32.totalorder %s18, 1
      %p78 = por %p76, %p77
      %p79 = scmp.ne.s32.totalorder %s68, %s69
      %p80 = scmp.eq.s32.totalorder %s18, 0
      %p81 = por %p79, %p80
      %p82 = scmp.ne.s32.totalorder %s68, %s69
      %p83 = scmp.eq.s32.totalorder %s19, 1
      %p84 = por %p82, %p83
      %p86 = scmp.ne.s32.totalorder %s69, %s85
      %p87 = scmp.eq.s32.totalorder %s19, 0
      %p88 = por %p86, %p87
      %s90 = sadd.s32 %s89, 1
      %p93 = scmp.eq.s32.totalorder %s13, 1
      %p94 = scmp.ne.s32.totalorder %s89, %s91
      %p95 = scmp.eq.s32.totalorder %s13, 0
      %p96 = por %p94, %p95
      %p97 = scmp.ne.s32.totalorder %s89, %s91
      %p98 = scmp.eq.s32.totalorder %s18, 1
      %p99 = por %p97, %p98
      %p100 = scmp.ne.s32.totalorder %s91, %s92
      %p101 = scmp.eq.s32.totalorder %s18, 0
      %p102 = por %p100, %p101
      %p103 = scmp.ne.s32.totalorder %s91, %s92
      %p104 = scmp.eq.s32.totalorder %s19, 1
      %p105 = por %p103, %p104
      %p107 = scmp.ne.s32.totalorder %s92, %s106
      %p108 = scmp.eq.s32.totalorder %s19, 0
      %p109 = por %p107, %p108
      %s111 = sadd.s32 %s110, 1
      %p114 = scmp.eq.s32.totalorder %s13, 1
      %p115 = scmp.ne.s32.totalorder %s110, %s112
      %p116 = scmp.eq.s32.totalorder %s13, 0
      %p117 = por %p115, %p116
      %p118 = scmp.ne.s32.totalorder %s110, %s112
      %p119 = scmp.eq.s32.totalorder %s18, 1
      %p120 = por %p118, %p119
      %p121 = scmp.ne.s32.totalorder %s112, %s113
      %p122 = scmp.eq.s32.totalorder %s18, 0
      %p123 = por %p121, %p122
      %p124 = scmp.ne.s32.totalorder %s112, %s113
      %p125 = scmp.eq.s32.totalorder %s19, 1
      %p126 = por %p124, %p125
      %p128 = scmp.ne.s32.totalorder %s113, %s127
      %p129 = scmp.eq.s32.totalorder %s19, 0
      %p130 = por %p128, %p129
      %s132 = sadd.s32 %s131, 1
      %p135 = scmp.eq.s32.totalorder %s13, 1
      %p136 = scmp.ne.s32.totalorder %s131, %s133
      %p137 = scmp.eq.s32.totalorder %s13, 0
      %p138 = por %p136, %p137
      %p139 = scmp.ne.s32.totalorder %s131, %s133
      %p140 = scmp.eq.s32.totalorder %s18, 1
      %p141 = por %p139, %p140
      %p142 = scmp.ne.s32.totalorder %s133, %s134
      %p143 = scmp.eq.s32.totalorder %s18, 0
      %p144 = por %p142, %p143
      %p145 = scmp.ne.s32.totalorder %s133, %s134
      %p146 = scmp.eq.s32.totalorder %s19, 1
      %p147 = por %p145, %p146
      %p149 = scmp.ne.s32.totalorder %s134, %s148
      %p150 = scmp.eq.s32.totalorder %s19, 0
      %p151 = por %p149, %p150
      %s153 = sadd.s32 %s152, 1
      %p156 = scmp.eq.s32.totalorder %s13, 1
      %p157 = scmp.ne.s32.totalorder %s152, %s154
      %p158 = scmp.eq.s32.totalorder %s13, 0
      %p159 = por %p157, %p158
      %p160 = scmp.ne.s32.totalorder %s152, %s154
      %p161 = scmp.eq.s32.totalorder %s18, 1
      %p162 = por %p160, %p161
      %p163 = scmp.ne.s32.totalorder %s154, %s155
      %p164 = scmp.eq.s32.totalorder %s18, 0
      %p165 = por %p163, %p164
      %p166 = scmp.ne.s32.totalorder %s154, %s155
      %p167 = scmp.eq.s32.totalorder %s19, 1
      %p168 = por %p166, %p167
      %p170 = scmp.ne.s32.totalorder %s155, %s169
      %p171 = scmp.eq.s32.totalorder %s19, 0
      %p172 = por %p170, %p171
      %s173 = ssub.s32 %s20, %s32
      %p174 = scmp.eq.s32.totalorder %s173, 0
      %s176 = sadd.s32 %s175, 1
      %s177 = scalar_select %p174, %s175, %s176
      %p180 = pneg %p174
      %p181 = scmp.eq.s32.totalorder %s13, 1
      %p182 = por %p180, %p181
      %p183 = scmp.ne.s32.totalorder %s175, %s178
      %p184 = scmp.eq.s32.totalorder %s13, 0
      %p185 = por %p183, %p184
      %p186 = scmp.ne.s32.totalorder %s175, %s178
      %p187 = scmp.eq.s32.totalorder %s18, 1
      %p188 = por %p186, %p187
      %p189 = scmp.ne.s32.totalorder %s178, %s179
      %p190 = scmp.eq.s32.totalorder %s18, 0
      %p191 = por %p189, %p190
      %p192 = scmp.ne.s32.totalorder %s178, %s179
      %p193 = scmp.eq.s32.totalorder %s19, 1
      %p194 = por %p192, %p193
      %p196 = scmp.ne.s32.totalorder %s179, %s195
      %p197 = scmp.eq.s32.totalorder %s19, 0
      %p198 = por %p196, %p197
      %p199 = scmp.le.s32.totalorder 1, %s13
      %p200 = scmp.lt.s32.totalorder %s13, 3
      %p201 = pnand %p199, %p200
      %p202 = pneg %p201
      // Predicated region
      $region9: #{tpu_custom_call.1} parent=5 // pred_check
        _
      $region10: #{tpu_custom_call.1} parent=5 // pred_check_branch
        %204 = sbr.rel (%p201) target = $region12
      $region11: #{tpu_custom_call.1} parent=5 // pred_region
        %s205 = ssub.s32 %s13, 1
        // Predicated region
        $region13: #{tpu_custom_call.1} parent=11 // pred_check
          %p206 = pneg %p102
        $region14: #{tpu_custom_call.1} parent=11 // pred_check_branch
          %208 = sbr.rel (%p206) target = $region16
        $region15: #{tpu_custom_call.1} parent=11 // pred_region
          _
        $region16: #{tpu_custom_call.1} parent=11 // pred_fallthru
          _
        // Predicated region
        $region17: #{tpu_custom_call.1} parent=11 // pred_check
          %p209 = pneg %p123
        $region18: #{tpu_custom_call.1} parent=11 // pred_check_branch
          %211 = sbr.rel (%p209) target = $region20
        $region19: #{tpu_custom_call.1} parent=11 // pred_region
          _
        $region20: #{tpu_custom_call.1} parent=11 // pred_fallthru
          _
        // Predicated region
        $region21: #{tpu_custom_call.1} parent=11 // pred_check
          %p212 = pneg %p144
        $region22: #{tpu_custom_call.1} parent=11 // pred_check_branch
          %214 = sbr.rel (%p212) target = $region24
        $region23: #{tpu_custom_call.1} parent=11 // pred_region
          _
        $region24: #{tpu_custom_call.1} parent=11 // pred_fallthru
          _
        // Predicated region
        $region25: #{tpu_custom_call.1} parent=11 // pred_check
          %p215 = pneg %p165
        $region26: #{tpu_custom_call.1} parent=11 // pred_check_branch
          %217 = sbr.rel (%p215) target = $region28
        $region27: #{tpu_custom_call.1} parent=11 // pred_region
          _
        $region28: #{tpu_custom_call.1} parent=11 // pred_fallthru
          _
      $region12: #{tpu_custom_call.1} parent=5 // pred_fallthru
        _
      %p218 = scmp.lt.s32.totalorder %s13, 2
      // Predicated region
      $region29: #{tpu_custom_call.1} parent=5 // pred_check
        %p219 = pneg %p218
      $region30: #{tpu_custom_call.1} parent=5 // pred_check_branch
        %221 = sbr.rel (%p219) target = $region32
      $region31: #{tpu_custom_call.1} parent=5 // pred_region
        // Predicated region
        $region33: #{tpu_custom_call.1} parent=31 // pred_check
          %p222 = pneg %p47
        $region34: #{tpu_custom_call.1} parent=31 // pred_check_branch
          %224 = sbr.rel (%p222) target = $region36
        $region35: #{tpu_custom_call.1} parent=31 // pred_region
          %s225 = sand.u32 %s37, 1
          %s226 = sand.u32 %s37, 1
          %s227 = smul.addr %s226, 16
          %s228 = scalar_lea.vmem [#allocation4], %s227
          %s229 = smul.u32 2, %s20
          %s230 = smul.u32 2, %s21
          %s231 = smul.addr %s229, 4
          %s232 = sadd.s32 %s230, %s231
          %s233 = smul.addr %s232, 4
          %s234 = scalar_lea.vmem %s0, %s233
          // Predicated region
          $region37: #{tpu_custom_call.1} parent=35 // pred_check
            _
          $region38: #{tpu_custom_call.1} parent=35 // pred_check_branch
            %236 = sbr.rel (0) target = $region40
          $region39: #{tpu_custom_call.1} parent=35 // pred_region
            // Predicated region
            $region41: #{tpu_custom_call.1} parent=39 // pred_check
              _
            $region42: #{tpu_custom_call.1} parent=39 // pred_check_branch
              %238 = sbr.rel target = $region44
            $region43: #{tpu_custom_call.1} parent=39 // pred_region
              // Predicated region
              $region56: #{tpu_custom_call.1} parent=43 // pred_check
                _
              $region57: #{tpu_custom_call.1} parent=43 // pred_check_branch
                %259 = sbr.rel (0) target = $region59
              $region58: #{tpu_custom_call.1} parent=43 // pred_region
                loop: start=0, step=1, limit=1
                $region60: #{tpu_custom_call.1} parent=58 // loop_pre_header
                  _
                $region61: #{tpu_custom_call.1} parent=58 // loop_header
                  %s261 = sphi 0, %s265
                  %p262 = scmp.ge.s32.totalorder %s261, 1
                  %s266 = sphi %s234, %s234
                  %s267 = sphi %s228, %s228
                $region62: #{tpu_custom_call.1} parent=58 // loop_header_branch
                  %264 = sbr.rel (%p262) target = $region66
                $region63: #{tpu_custom_call.1} parent=58 // loop_body
                  _
                $region64: #{tpu_custom_call.1} parent=58 // loop_footer
                  %s265 = sadd.s32 1, %s261
                $region65: #{tpu_custom_call.1} parent=58 // loop_footer_branch
                  %260 = sbr.rel target = $region61
                $region66: #{tpu_custom_call.1} parent=58 // loop_exit
                  _
                loop: start=0, step=1, limit=1
                $region67: #{tpu_custom_call.1} parent=58 // loop_pre_header
                  _
                $region68: #{tpu_custom_call.1} parent=58 // loop_header
                  %s270 = sphi 0, %s274
                  %p271 = scmp.ge.s32.totalorder %s270, 1
                  %s275 = sphi %s234, %s234
                  %s276 = sphi %s228, %s228
                $region69: #{tpu_custom_call.1} parent=58 // loop_header_branch
                  %273 = sbr.rel (%p271) target = $region73
                $region70: #{tpu_custom_call.1} parent=58 // loop_body
                  %v277 = vld [vmem:[%s275] sm:$0xf]
                  %278 = vst [vmem:[%s276] sm:$0xf] %v277
                  %v279 = vld [vmem:[%s275 + $0x4] sm:$0xf]
                  %280 = vst [vmem:[%s276 + $0x4] sm:$0xf] %v279
                  %v281 = vld [vmem:[%s275 + $0x10] sm:$0xf]
                  %282 = vst [vmem:[%s276 + $0x8] sm:$0xf] %v281
                  %v283 = vld [vmem:[%s275 + $0x14] sm:$0xf]
                  %284 = vst [vmem:[%s276 + $0xc] sm:$0xf] %v283
                $region71: #{tpu_custom_call.1} parent=58 // loop_footer
                  %s274 = sadd.s32 1, %s270
                $region72: #{tpu_custom_call.1} parent=58 // loop_footer_branch
                  %269 = sbr.rel target = $region68
                $region73: #{tpu_custom_call.1} parent=58 // loop_exit
                  _
              $region59: #{tpu_custom_call.1} parent=43 // pred_fallthru
                _
            $region44: #{tpu_custom_call.1} parent=39 // pred_fallthru
              _
            // Predicated region
            $region45: #{tpu_custom_call.1} parent=39 // pred_check
              _
            $region46: #{tpu_custom_call.1} parent=39 // pred_check_branch
              %240 = sbr.rel (0) target = $region48
            $region47: #{tpu_custom_call.1} parent=39 // pred_region
              loop: start=0, step=1, limit=1
              $region49: #{tpu_custom_call.1} parent=47 // loop_pre_header
                _
              $region50: #{tpu_custom_call.1} parent=47 // loop_header
                %s243 = sphi 0, %s247
                %p244 = scmp.ge.s32.totalorder %s243, 1
                %s248 = sphi %s234, %s234
                %s249 = sphi %s228, %s228
              $region51: #{tpu_custom_call.1} parent=47 // loop_header_branch
                %246 = sbr.rel (%p244) target = $region55
              $region52: #{tpu_custom_call.1} parent=47 // loop_body
                %v250 = vld [vmem:[%s248] sm:$0xf]
                %251 = vst [vmem:[%s249] sm:$0xf] %v250
                %v252 = vld [vmem:[%s248 + $0x4] sm:$0xf]
                %253 = vst [vmem:[%s249 + $0x4] sm:$0xf] %v252
                %v254 = vld [vmem:[%s248 + $0x10] sm:$0xf]
                %255 = vst [vmem:[%s249 + $0x8] sm:$0xf] %v254
                %v256 = vld [vmem:[%s248 + $0x14] sm:$0xf]
                %257 = vst [vmem:[%s249 + $0xc] sm:$0xf] %v256
              $region53: #{tpu_custom_call.1} parent=47 // loop_footer
                %s247 = sadd.s32 1, %s243
              $region54: #{tpu_custom_call.1} parent=47 // loop_footer_branch
                %242 = sbr.rel target = $region50
              $region55: #{tpu_custom_call.1} parent=47 // loop_exit
                _
            $region48: #{tpu_custom_call.1} parent=39 // pred_fallthru
              _
          $region40: #{tpu_custom_call.1} parent=35 // pred_fallthru
            _
          %285 = vnop
        $region36: #{tpu_custom_call.1} parent=31 // pred_fallthru
          _
        // Predicated region
        $region74: #{tpu_custom_call.1} parent=31 // pred_check
          %p286 = pneg %p75
        $region75: #{tpu_custom_call.1} parent=31 // pred_check_branch
          %288 = sbr.rel (%p286) target = $region77
        $region76: #{tpu_custom_call.1} parent=31 // pred_region
          %s289 = sand.u32 %s65, 1
          %s290 = sand.u32 %s65, 1
          %s291 = smul.addr %s290, 16
          %s292 = scalar_lea.vmem [#allocation5], %s291
          %s293 = smul.u32 2, %s20
          %s294 = smul.u32 2, %s21
          %s295 = smul.addr %s293, 4
          %s296 = sadd.s32 %s294, %s295
          %s297 = smul.addr %s296, 4
          %s298 = scalar_lea.vmem %s1, %s297
          // Predicated region
          $region78: #{tpu_custom_call.1} parent=76 // pred_check
            _
          $region79: #{tpu_custom_call.1} parent=76 // pred_check_branch
            %300 = sbr.rel (0) target = $region81
          $region80: #{tpu_custom_call.1} parent=76 // pred_region
            // Predicated region
            $region82: #{tpu_custom_call.1} parent=80 // pred_check
              _
            $region83: #{tpu_custom_call.1} parent=80 // pred_check_branch
              %302 = sbr.rel target = $region85
            $region84: #{tpu_custom_call.1} parent=80 // pred_region
              // Predicated region
              $region97: #{tpu_custom_call.1} parent=84 // pred_check
                _
              $region98: #{tpu_custom_call.1} parent=84 // pred_check_branch
                %323 = sbr.rel (0) target = $region100
              $region99: #{tpu_custom_call.1} parent=84 // pred_region
                loop: start=0, step=1, limit=1
                $region101: #{tpu_custom_call.1} parent=99 // loop_pre_header
                  _
                $region102: #{tpu_custom_call.1} parent=99 // loop_header
                  %s325 = sphi 0, %s329
                  %p326 = scmp.ge.s32.totalorder %s325, 1
                  %s330 = sphi %s298, %s298
                  %s331 = sphi %s292, %s292
                $region103: #{tpu_custom_call.1} parent=99 // loop_header_branch
                  %328 = sbr.rel (%p326) target = $region107
                $region104: #{tpu_custom_call.1} parent=99 // loop_body
                  _
                $region105: #{tpu_custom_call.1} parent=99 // loop_footer
                  %s329 = sadd.s32 1, %s325
                $region106: #{tpu_custom_call.1} parent=99 // loop_footer_branch
                  %324 = sbr.rel target = $region102
                $region107: #{tpu_custom_call.1} parent=99 // loop_exit
                  _
                loop: start=0, step=1, limit=1
                $region108: #{tpu_custom_call.1} parent=99 // loop_pre_header
                  _
                $region109: #{tpu_custom_call.1} parent=99 // loop_header
                  %s334 = sphi 0, %s338
                  %p335 = scmp.ge.s32.totalorder %s334, 1
                  %s339 = sphi %s298, %s298
                  %s340 = sphi %s292, %s292
                $region110: #{tpu_custom_call.1} parent=99 // loop_header_branch
                  %337 = sbr.rel (%p335) target = $region114
                $region111: #{tpu_custom_call.1} parent=99 // loop_body
                  %v341 = vld [vmem:[%s339] sm:$0xf]
                  %342 = vst [vmem:[%s340] sm:$0xf] %v341
                  %v343 = vld [vmem:[%s339 + $0x4] sm:$0xf]
                  %344 = vst [vmem:[%s340 + $0x4] sm:$0xf] %v343
                  %v345 = vld [vmem:[%s339 + $0x10] sm:$0xf]
                  %346 = vst [vmem:[%s340 + $0x8] sm:$0xf] %v345
                  %v347 = vld [vmem:[%s339 + $0x14] sm:$0xf]
                  %348 = vst [vmem:[%s340 + $0xc] sm:$0xf] %v347
                $region112: #{tpu_custom_call.1} parent=99 // loop_footer
                  %s338 = sadd.s32 1, %s334
                $region113: #{tpu_custom_call.1} parent=99 // loop_footer_branch
                  %333 = sbr.rel target = $region109
                $region114: #{tpu_custom_call.1} parent=99 // loop_exit
                  _
              $region100: #{tpu_custom_call.1} parent=84 // pred_fallthru
                _
            $region85: #{tpu_custom_call.1} parent=80 // pred_fallthru
              _
            // Predicated region
            $region86: #{tpu_custom_call.1} parent=80 // pred_check
              _
            $region87: #{tpu_custom_call.1} parent=80 // pred_check_branch
              %304 = sbr.rel (0) target = $region89
            $region88: #{tpu_custom_call.1} parent=80 // pred_region
              loop: start=0, step=1, limit=1
              $region90: #{tpu_custom_call.1} parent=88 // loop_pre_header
                _
              $region91: #{tpu_custom_call.1} parent=88 // loop_header
                %s307 = sphi 0, %s311
                %p308 = scmp.ge.s32.totalorder %s307, 1
                %s312 = sphi %s298, %s298
                %s313 = sphi %s292, %s292
              $region92: #{tpu_custom_call.1} parent=88 // loop_header_branch
                %310 = sbr.rel (%p308) target = $region96
              $region93: #{tpu_custom_call.1} parent=88 // loop_body
                %v314 = vld [vmem:[%s312] sm:$0xf]
                %315 = vst [vmem:[%s313] sm:$0xf] %v314
                %v316 = vld [vmem:[%s312 + $0x4] sm:$0xf]
                %317 = vst [vmem:[%s313 + $0x4] sm:$0xf] %v316
                %v318 = vld [vmem:[%s312 + $0x10] sm:$0xf]
                %319 = vst [vmem:[%s313 + $0x8] sm:$0xf] %v318
                %v320 = vld [vmem:[%s312 + $0x14] sm:$0xf]
                %321 = vst [vmem:[%s313 + $0xc] sm:$0xf] %v320
              $region94: #{tpu_custom_call.1} parent=88 // loop_footer
                %s311 = sadd.s32 1, %s307
              $region95: #{tpu_custom_call.1} parent=88 // loop_footer_branch
                %306 = sbr.rel target = $region91
              $region96: #{tpu_custom_call.1} parent=88 // loop_exit
                _
            $region89: #{tpu_custom_call.1} parent=80 // pred_fallthru
              _
          $region81: #{tpu_custom_call.1} parent=76 // pred_fallthru
            _
          %349 = vnop
        $region77: #{tpu_custom_call.1} parent=31 // pred_fallthru
          _
      $region32: #{tpu_custom_call.1} parent=5 // pred_fallthru
        _
      %p350 = scmp.le.s32.totalorder 1, %s13
      %p351 = scmp.lt.s32.totalorder %s13, 3
      %p352 = pnand %p350, %p351
      %p353 = pneg %p352
      // Predicated region
      $region115: #{tpu_custom_call.1} parent=5 // pred_check
        _
      $region116: #{tpu_custom_call.1} parent=5 // pred_check_branch
        %355 = sbr.rel (%p352) target = $region118
      $region117: #{tpu_custom_call.1} parent=5 // pred_region
        %s356 = ssub.s32 %s13, 1
        %s357 = sand.u32 %s40, 1
        %s358 = sand.u32 %s40, 1
        %s359 = smul.addr %s358, 16
        %s360 = scalar_lea.vmem [#allocation4], %s359
        // Predicated region
        $region119: #{tpu_custom_call.1} parent=117 // pred_check
          %p361 = pneg %p53
        $region120: #{tpu_custom_call.1} parent=117 // pred_check_branch
          %363 = sbr.rel (%p361) target = $region122
        $region121: #{tpu_custom_call.1} parent=117 // pred_region
          _
        $region122: #{tpu_custom_call.1} parent=117 // pred_fallthru
          _
        %s364 = sand.u32 %s68, 1
        %s365 = sand.u32 %s68, 1
        %s366 = smul.addr %s365, 16
        %s367 = scalar_lea.vmem [#allocation5], %s366
        // Predicated region
        $region123: #{tpu_custom_call.1} parent=117 // pred_check
          %p368 = pneg %p81
        $region124: #{tpu_custom_call.1} parent=117 // pred_check_branch
          %370 = sbr.rel (%p368) target = $region126
        $region125: #{tpu_custom_call.1} parent=117 // pred_region
          _
        $region126: #{tpu_custom_call.1} parent=117 // pred_fallthru
          _
        %s371 = sand.u32 %s40, 1
        %s372 = sand.u32 %s40, 1
        %s373 = smul.addr %s372, 16
        %s374 = scalar_lea.vmem [#allocation4], %s373
        %p375 = pneg %p53
        %p376 = pneg %p50
        %s377 = sand.u32 %s68, 1
        %s378 = sand.u32 %s68, 1
        %s379 = smul.addr %s378, 16
        %s380 = scalar_lea.vmem [#allocation5], %s379
        %p381 = pneg %p81
        %p382 = pneg %p78
        %p383 = pneg %p102
        %p384 = pneg %p99
        %p385 = pneg %p123
        %p386 = pneg %p120
        %p387 = pneg %p144
        %p388 = pneg %p141
        %p389 = pneg %p165
        %p390 = pneg %p162
        %p391 = pneg %p191
        %p392 = pneg %p188
        %s393 = smul.u32 2, %s22
        %s394 = smul.u32 2, %s23
        %s395 = smul.u32 2, %s22
        %s396 = smul.u32 2, %s23
        %p397 = scmp.eq.s32.totalorder %s23, 0
        // Predicated region
        $region127: #{tpu_custom_call.1} parent=117 // pred_check
          %p398 = pneg %p397
        $region128: #{tpu_custom_call.1} parent=117 // pred_check_branch
          %400 = sbr.rel (%p398) target = $region130
        $region129: #{tpu_custom_call.1} parent=117 // pred_region
          %vm401 = vcmask 254976
          %402 = vst.msk [vmem:[#allocation2] sm:$0x3] %vm401, 0.0
          %vm403 = vcmask 1024
          %404 = vst.msk [vmem:[#allocation3] sm:$0x3] %vm403, 0.0
        $region130: #{tpu_custom_call.1} parent=117 // pred_fallthru
          _
        %v405 = vld [vmem:[%s360] sm:$0xf]
        %v406 = vld [vmem:[%s360 + $0x4] sm:$0xf]
        %v407 = vld [vmem:[%s360 + $0x8] sm:$0xf]
        %v408 = vld [vmem:[%s360 + $0xc] sm:$0xf]
        %v409 = vunpack.c.l.bf16 %v405
        %v410 = vunpack.c.l.bf16 %v406
        %v411 = vunpack.c.l.bf16 %v407
        %v412 = vunpack.c.l.bf16 %v408
        %v413 = vld [vmem:[%s367] sm:$0xf]
        %v414 = vld [vmem:[%s367 + $0x4] sm:$0xf]
        %v415 = vld [vmem:[%s367 + $0x8] sm:$0xf]
        %v416 = vld [vmem:[%s367 + $0xc] sm:$0xf]
        %v417 = vunpack.c.l.bf16 %v413
        %v418 = vunpack.c.l.bf16 %v414
        %v419 = vunpack.c.l.bf16 %v415
        %v420 = vunpack.c.l.bf16 %v416
        %v421 = vld [vmem:[#allocation2] sm:$0x3]
        %423 = vset.pattern.permute.xlu0 0
        %424 = vperm.xlu0 %423, %v417
        %v425 = vpop.permute.xlu0 %424
        %428 = vset.pattern.permute.xlu0 0
        %429 = vperm.xlu0 %428, %v418
        %v430 = vpop.permute.xlu0 %429
        %433 = vset.pattern.permute.xlu0 0
        %434 = vperm.xlu0 %433, %v419
        %v435 = vpop.permute.xlu0 %434
        %438 = vset.pattern.permute.xlu0 0
        %439 = vperm.xlu0 %438, %v420
        %v440 = vpop.permute.xlu0 %439
        %v442 = vmul.f32 %v409, %v425
        %v443 = vmul.f32 %v410, %v430
        %v444 = vmul.f32 %v411, %v435
        %v445 = vmul.f32 %v412, %v440
        %vm446 = vcmask 261120
        %v447 = vsel %vm446, %v442, 0.0
        %v448 = vsel %vm446, %v443, 0.0
        %v449 = vadd.f32 %v447, %v448
        %v450 = vrot.slane %v449, 4
        %v451 = vadd.f32 %v449, %v450
        %v452 = vrot.slane %v451, 2
        %v453 = vadd.f32 %v451, %v452
        %v454 = vrot.slane %v453, 1
        %v455 = vadd.f32 %v453, %v454
        %v456 = vsel %vm446, %v444, 0.0
        %v457 = vsel %vm446, %v445, 0.0
        %v458 = vadd.f32 %v456, %v457
        %v459 = vrot.slane %v458, 4
        %v460 = vadd.f32 %v458, %v459
        %v461 = vrot.slane %v460, 2
        %v462 = vadd.f32 %v460, %v461
        %v463 = vrot.slane %v462, 1
        %v464 = vadd.f32 %v462, %v463
        %vm467 = vcmask 1041409
        %v468 = vsel %vm467, %v464, %v455
        %v470 = vadd.f32 %v421, %v468
        %vm471 = vcmask 254976
        %472 = vst.msk [vmem:[#allocation2] sm:$0x3] %vm471, %v470
        %v473 = vld [vmem:[#allocation3] sm:$0x3]
        %vm474 = vcmask 7168
        %v475 = vsel %vm474, %v417, 0.0
        %v476 = vsel %vm474, %v418, 0.0
        %v477 = vadd.f32 %v475, %v476
        %v478 = vrot.slane %v477, 4
        %v479 = vadd.f32 %v477, %v478
        %v480 = vrot.slane %v479, 2
        %v481 = vadd.f32 %v479, %v480
        %v482 = vrot.slane %v481, 1
        %v483 = vadd.f32 %v481, %v482
        %v484 = vsel %vm474, %v419, 0.0
        %v485 = vsel %vm474, %v420, 0.0
        %v486 = vadd.f32 %v484, %v485
        %v487 = vrot.slane %v486, 4
        %v488 = vadd.f32 %v486, %v487
        %v489 = vrot.slane %v488, 2
        %v490 = vadd.f32 %v488, %v489
        %v491 = vrot.slane %v490, 1
        %v492 = vadd.f32 %v490, %v491
        %v495 = vsel %vm467, %v492, %v483
        %v497 = vadd.f32 %v473, %v495
        %vm498 = vcmask 1024
        %499 = vst.msk [vmem:[#allocation3] sm:$0x3] %vm498, %v497
        %p500 = scmp.eq.s32.totalorder %s23, 1
        // Predicated region
        $region131: #{tpu_custom_call.1} parent=117 // pred_check
          %p501 = pneg %p500
        $region132: #{tpu_custom_call.1} parent=117 // pred_check_branch
          %503 = sbr.rel (%p501) target = $region134
        $region133: #{tpu_custom_call.1} parent=117 // pred_region
          %v504 = vld [vmem:[#allocation3] sm:$0x3]
          %v505 = vmax.f32 %v504, 1e-09
          %v506 = vld [vmem:[#allocation2] sm:$0x3]
          %v507 = vrcp.pop %v505
          %509 = vset.pattern.permute.xlu0 0
          %510 = vperm.xlu0 %509, %v507
          %v511 = vpop.permute.xlu0 %510
          %v513 = vmul.f32 %v506, %v511
          %v514 = vld [vmem:[%s2] sm:$0xff]
          %v515 = vld [vmem:[%s2 + $0x8] sm:$0xff]
          %v516 = vld [vmem:[%s2 + $0x10] sm:$0xff]
          %v517 = vld [vmem:[%s2 + $0x18] sm:$0xff]
          %v518 = vld [vmem:[%s3] sm:$0x1]
          %v520 = vlaneseq
          %v521 = vshrl.u32 %v520, 7
          %v522 = vsub.s32 0, %v521
          %v523 = vrot.slane %v518, %v522
          %v526 = vsel %vm446, %v513, 0
          %528 = vmatprep.subr.mxu0 0.0
          %529 = vmatpush1.msra.mxu0 %v514
          %530 = vmatprep.subr.mxu0 0.0
          %531 = vmatpush1.msra.mxu0 %v515
          %532 = vmatprep.subr.mxu0 0.0
          %533 = vmatpush1.msra.mxu0 %v516
          %534 = vmatprep.subr.mxu0 0.0
          %535 = vmatpush1.msra.mxu0 %v517
          %536 = vmatprep.subr.mxu0 0.0
          %537 = vmatpush1.msra.mxu0 0.0
          %538 = vmatprep.subr.mxu0 0.0
          %539 = vmatpush1.msra.mxu0 0.0
          %540 = vmatprep.subr.mxu0 0.0
          %541 = vmatpush1.msra.mxu0 0.0
          %542 = vmatprep.subr.mxu0 0.0
          %543 = vmatpush1.msra.mxu0 0.0
          %544 = vmatprep.subr.mxu0 0.0
          %545 = vmatpush1.msra.mxu0 0.0
          %546 = vmatprep.subr.mxu0 0.0
          %547 = vmatpush1.msra.mxu0 0.0
          %548 = vmatprep.subr.mxu0 0.0
          %549 = vmatpush1.msra.mxu0 0.0
          %550 = vmatprep.subr.mxu0 0.0
          %551 = vmatpush1.msra.mxu0 0.0
          %552 = vmatprep.subr.mxu0 0.0
          %553 = vmatpush1.msra.mxu0 0.0
          %554 = vmatprep.subr.mxu0 0.0
          %555 = vmatpush1.msra.mxu0 0.0
          %556 = vmatprep.subr.mxu0 0.0
          %557 = vmatpush1.msra.mxu0 0.0
          %558 = vmatprep.subr.mxu0 0.0
          %559 = vmatpush1.msra.mxu0 0.0
          %560 = vmatprep.subr.mxu0 0.0
          %561 = vmatpush1.msra.mxu0 0.0
          %562 = vmatprep.subr.mxu0 0.0
          %563 = vmatpush1.msra.mxu0 0.0
          %564 = vmatprep.subr.mxu0 0.0
          %565 = vmatpush1.msra.mxu0 0.0
          %566 = vmatprep.subr.mxu0 0.0
          %567 = vmatpush1.msra.mxu0 0.0
          %568 = vmatprep.subr.mxu0 0.0
          %569 = vmatpush1.msra.mxu0 0.0
          %570 = vmatprep.subr.mxu0 0.0
          %571 = vmatpush1.msra.mxu0 0.0
          %572 = vmatprep.subr.mxu0 0.0
          %573 = vmatpush1.msra.mxu0 0.0
          %574 = vmatprep.subr.mxu0 0.0
          %575 = vmatpush1.msra.mxu0 0.0
          %576 = vmatprep.subr.mxu0 0.0
          %577 = vmatpush1.msra.mxu0 0.0
          %578 = vmatprep.subr.mxu0 0.0
          %579 = vmatpush1.msra.mxu0 0.0
          %580 = vmatprep.subr.mxu0 0.0
          %581 = vmatpush1.msra.mxu0 0.0
          %582 = vmatprep.subr.mxu0 0.0
          %583 = vmatpush1.msra.mxu0 0.0
          %584 = vmatprep.subr.mxu0 0.0
          %585 = vmatpush1.msra.mxu0 0.0
          %586 = vmatprep.subr.mxu0 0.0
          %587 = vmatpush1.msra.mxu0 0.0
          %588 = vmatprep.subr.mxu0 0.0
          %589 = vmatpush1.msra.mxu0 0.0
          %590 = vmatprep.subr.mxu0 0.0
          %591 = vmatpush1.msra.mxu0 0.0
          %592 = vmatprep.mubr.f32.mxu0 0.0
          %593 = vmatmul.mubr.f32.gmra.mrb[0].mxu0 %v526
          %v594 = vpop.f32.mrb[0].mxu0
          %v595 = vadd.f32 %v523, %v594
          %v596 = vpop.f32.mrb[0].mxu0
          %597 = vdwg.mxu0
          %v598 = vmax.f32 %v595, 0.0
          %v599 = vld [vmem:[%s4] sm:$0xff]
          %v600 = vld [vmem:[%s4 + $0x8] sm:$0xff]
          %v601 = vld [vmem:[%s4 + $0x10] sm:$0xff]
          %v602 = vld [vmem:[%s4 + $0x18] sm:$0xff]
          %v603 = vld [vmem:[%s4 + $0x20] sm:$0xff]
          %v604 = vld [vmem:[%s4 + $0x28] sm:$0xff]
          %v605 = vld [vmem:[%s4 + $0x30] sm:$0xff]
          %v606 = vld [vmem:[%s4 + $0x38] sm:$0xff]
          %v607 = vld [vmem:[%s4 + $0x40] sm:$0xff]
          %v608 = vld [vmem:[%s4 + $0x48] sm:$0xff]
          %v609 = vld [vmem:[%s4 + $0x50] sm:$0xff]
          %v610 = vld [vmem:[%s4 + $0x58] sm:$0xff]
          %v611 = vld [vmem:[%s4 + $0x60] sm:$0xff]
          %v612 = vld [vmem:[%s4 + $0x68] sm:$0xff]
          %v613 = vld [vmem:[%s4 + $0x70] sm:$0xff]
          %v614 = vld [vmem:[%s4 + $0x78] sm:$0xff]
          %v615 = vld [vmem:[%s5] sm:$0x1]
          %v617 = vlaneseq
          %v618 = vshrl.u32 %v617, 7
          %v619 = vsub.s32 0, %v618
          %v620 = vrot.slane %v615, %v619
          %622 = vmatprep.subr.mxu0 0.0
          %623 = vmatpush1.msra.mxu0 %v599
          %624 = vmatprep.subr.mxu0 0.0
          %625 = vmatpush1.msra.mxu0 %v600
          %626 = vmatprep.subr.mxu0 0.0
          %627 = vmatpush1.msra.mxu0 %v601
          %628 = vmatprep.subr.mxu0 0.0
          %629 = vmatpush1.msra.mxu0 %v602
          %630 = vmatprep.subr.mxu0 0.0
          %631 = vmatpush1.msra.mxu0 %v603
          %632 = vmatprep.subr.mxu0 0.0
          %633 = vmatpush1.msra.mxu0 %v604
          %634 = vmatprep.subr.mxu0 0.0
          %635 = vmatpush1.msra.mxu0 %v605
          %636 = vmatprep.subr.mxu0 0.0
          %637 = vmatpush1.msra.mxu0 %v606
          %638 = vmatprep.subr.mxu0 0.0
          %639 = vmatpush1.msra.mxu0 %v607
          %640 = vmatprep.subr.mxu0 0.0
          %641 = vmatpush1.msra.mxu0 %v608
          %642 = vmatprep.subr.mxu0 0.0
          %643 = vmatpush1.msra.mxu0 %v609
          %644 = vmatprep.subr.mxu0 0.0
          %645 = vmatpush1.msra.mxu0 %v610
          %646 = vmatprep.subr.mxu0 0.0
          %647 = vmatpush1.msra.mxu0 %v611
          %648 = vmatprep.subr.mxu0 0.0
          %649 = vmatpush1.msra.mxu0 %v612
          %650 = vmatprep.subr.mxu0 0.0
          %651 = vmatpush1.msra.mxu0 %v613
          %652 = vmatprep.subr.mxu0 0.0
          %653 = vmatpush1.msra.mxu0 %v614
          %654 = vmatprep.subr.mxu0 0.0
          %655 = vmatpush1.msra.mxu0 0.0
          %656 = vmatprep.subr.mxu0 0.0
          %657 = vmatpush1.msra.mxu0 0.0
          %658 = vmatprep.subr.mxu0 0.0
          %659 = vmatpush1.msra.mxu0 0.0
          %660 = vmatprep.subr.mxu0 0.0
          %661 = vmatpush1.msra.mxu0 0.0
          %662 = vmatprep.subr.mxu0 0.0
          %663 = vmatpush1.msra.mxu0 0.0
          %664 = vmatprep.subr.mxu0 0.0
          %665 = vmatpush1.msra.mxu0 0.0
          %666 = vmatprep.subr.mxu0 0.0
          %667 = vmatpush1.msra.mxu0 0.0
          %668 = vmatprep.subr.mxu0 0.0
          %669 = vmatpush1.msra.mxu0 0.0
          %670 = vmatprep.subr.mxu0 0.0
          %671 = vmatpush1.msra.mxu0 0.0
          %672 = vmatprep.subr.mxu0 0.0
          %673 = vmatpush1.msra.mxu0 0.0
          %674 = vmatprep.subr.mxu0 0.0
          %675 = vmatpush1.msra.mxu0 0.0
          %676 = vmatprep.subr.mxu0 0.0
          %677 = vmatpush1.msra.mxu0 0.0
          %678 = vmatprep.subr.mxu0 0.0
          %679 = vmatpush1.msra.mxu0 0.0
          %680 = vmatprep.subr.mxu0 0.0
          %681 = vmatpush1.msra.mxu0 0.0
          %682 = vmatprep.subr.mxu0 0.0
          %683 = vmatpush1.msra.mxu0 0.0
          %684 = vmatprep.subr.mxu0 0.0
          %685 = vmatpush1.msra.mxu0 0.0
          %686 = vmatprep.mubr.f32.mxu0 0.0
          %687 = vmatmul.mubr.f32.gmra.mrb[0].mxu0 %v598
          %v688 = vpop.f32.mrb[0].mxu0
          %v689 = vadd.f32 %v620, %v688
          %v690 = vpop.f32.mrb[0].mxu0
          %691 = vdwg.mxu0
          %vm692 = vcmask 25600
          %693 = vst.msk [vmem:[#allocation6] sm:$0x3] %vm692, %v689
        $region134: #{tpu_custom_call.1} parent=117 // pred_fallthru
          _
        // Predicated region
        $region135: #{tpu_custom_call.1} parent=117 // pred_check
          %p694 = pneg %p188
        $region136: #{tpu_custom_call.1} parent=117 // pred_check_branch
          %696 = sbr.rel (%p694) target = $region138
        $region137: #{tpu_custom_call.1} parent=117 // pred_region
          %s698 = ssub.s32 32, 32
          %699 = vsyncadd [#allocation7], %s698
          %s700 = smul.addr %s22, 32
          %s701 = scalar_lea.hbm %s6, %s700
          %s703 = sshll.u32 [#allocation6], 4
          %s704 = int_to_ptr.vmem [resolvable:$true] %s703
          %706 = dma.vmem_to_hbm [thread:$0]  %s704, 32, %s701, [#allocation7]
        $region138: #{tpu_custom_call.1} parent=117 // pred_fallthru
          _
        // Predicated region
        $region139: #{tpu_custom_call.1} parent=117 // pred_check
          %p707 = pneg %p188
        $region140: #{tpu_custom_call.1} parent=117 // pred_check_branch
          %709 = sbr.rel (%p707) target = $region142
        $region141: #{tpu_custom_call.1} parent=117 // pred_region
          %710 = dma.done [#allocation7], 32
        $region142: #{tpu_custom_call.1} parent=117 // pred_fallthru
          _
      $region118: #{tpu_custom_call.1} parent=5 // pred_fallthru
        _
      %p711 = scmp.le.s32.totalorder 2, %s13
      // Predicated region
      $region143: #{tpu_custom_call.1} parent=5 // pred_check
        %p712 = pneg %p711
      $region144: #{tpu_custom_call.1} parent=5 // pred_check_branch
        %714 = sbr.rel (%p712) target = $region146
      $region145: #{tpu_custom_call.1} parent=5 // pred_region
        %s715 = ssub.s32 %s13, 2
      $region146: #{tpu_custom_call.1} parent=5 // pred_fallthru
        _
    $region6: #{tpu_custom_call.1} parent=1 // loop_footer
      %s17 = sadd.s32 1, %s13
    $region7: #{tpu_custom_call.1} parent=1 // loop_footer_branch
      %12 = sbr.rel target = $region3
    $region8: #{tpu_custom_call.1} parent=1 // loop_exit
      _
    %716 = vsyncpa [#allocation7], 1
    %s717 = scalar_lea.sflag [#allocation7], 1
    %718 = vsyncpa %s717, 1

// kernel: tpu_custom_call.1
$region0: #{tpu_custom_call.1}
  #allocation0 [shape = 'u32[]', space=smem, size = 0x4, offset = 0x4, fixed_abs, tag = 'smem constant byte address 0x4 - core index']
  #allocation1 [shape = 'u32[144,128]{1,0:T(1,128)}', space=vmem, size = 0x12000, scoped, tag = 'internal scratch']
  #allocation2 [shape = 'f32[2,32]{1,0:T(2,128)}', space=vmem, size = 0x400, scoped, tag = 'scratch operand']
  #allocation3 [shape = 'f32[2,1]{1,0:T(2,128)}', space=vmem, size = 0x400, scoped, tag = 'scratch operand']
  %s0 = inlined_call_operand.vmem [shape: bf16[2,32,32], index: 0, kind: input, shape index: {}]
  %s1 = inlined_call_operand.vmem [shape: bf16[2,32,1], index: 1, kind: input, shape index: {}]
  %s2 = inlined_call_operand.vmem [shape: f32[32,128], index: 2, kind: input, shape index: {}]
  %s3 = inlined_call_operand.vmem [shape: f32[1,128], index: 3, kind: input, shape index: {}]
  %s4 = inlined_call_operand.vmem [shape: f32[128,4], index: 4, kind: input, shape index: {}]
  %s5 = inlined_call_operand.vmem [shape: f32[1,4], index: 5, kind: input, shape index: {}]
  %s6 = inlined_call_operand.hbm [shape: f32[2,4], index: 6, kind: output, shape index: {}]
  %s7 = sld [smem:[#allocation0]]
  $region147: #{tpu_custom_call.1} parent=0
    _
  %s9 = ssub.s32 1, %s7
  %s10 = scalar_select 0, %s9, %s7
  $region1: #{tpu_custom_call.1} parent=0
    #allocation4 [shape = 'u8[16384]{0}', space=vmem, size = 0x4000, scoped, tag = 'input window, operand 0']
    #allocation5 [shape = 'u8[16384]{0}', space=vmem, size = 0x4000, scoped, tag = 'input window, operand 1']
    #allocation6 [shape = 'u8[1024]{0}', space=vmem, size = 0x400, scoped, tag = 'output window, operand 0, single buffered']
    #allocation7 [shape = 's32[2]{0}', space=sflag, size = 0x8, scoped, tag = 'scoped memory for tpu_custom_call.1']
    %11 = vsyncpa [#allocation7], 0
    loop: start=0, step=1, limit=4
    $region2: #{tpu_custom_call.1} parent=1 // loop_pre_header
      _
    $region3: #{tpu_custom_call.1} parent=1 // loop_header
      %s13 = sphi 0, %s17
      %p14 = scmp.ge.s32.totalorder %s13, 4
      %s20 = sphi 0, %s32
      %s21 = sphi 0, %s28
      %s22 = sphi 0, %s20
      %s23 = sphi 0, %s21
      %s24 = sphi 0, %s22
      %s25 = sphi 0, %s23
      %s37 = sphi 0, %s39
      %s40 = sphi 0, %s37
      %s41 = sphi 0, %s40
      %s57 = sphi 0, %s41
      %s65 = sphi 0, %s67
      %s68 = sphi 0, %s65
      %s69 = sphi 0, %s68
      %s85 = sphi 0, %s69
      %s89 = sphi 0, %s89
      %s91 = sphi 0, %s89
      %s92 = sphi 0, %s91
      %s106 = sphi 0, %s92
      %s110 = sphi 0, %s110
      %s112 = sphi 0, %s110
      %s113 = sphi 0, %s112
      %s127 = sphi 0, %s113
      %s131 = sphi 0, %s131
      %s133 = sphi 0, %s131
      %s134 = sphi 0, %s133
      %s148 = sphi 0, %s134
      %s152 = sphi 0, %s152
      %s154 = sphi 0, %s152
      %s155 = sphi 0, %s154
      %s169 = sphi 0, %s155
      %s175 = sphi 0, %s177
      %s178 = sphi 0, %s175
      %s179 = sphi 0, %s178
      %s195 = sphi 0, %s179
    $region4: #{tpu_custom_call.1} parent=1 // loop_header_branch
      %16 = sbr.rel (%p14) target = $region8
    $region5: #{tpu_custom_call.1} parent=1 // loop_body
      %s18 = ssub.s32 %s13, 1
      %s19 = ssub.s32 %s13, 2
      %s26 = sadd.s32 1, %s21
      %p27 = scmp.ge.s32.totalorder %s26, 2
      %s28 = scalar_select %p27, 0, %s26
      %s29 = sadd.s32 1, %s20
      %s30 = scalar_select %p27, %s29, %s20
      %p31 = scmp.ge.s32.totalorder %s30, 1
      %s32 = scalar_select %p31, 0, %s30
      %s33 = ssub.s32 %s20, %s32
      %s34 = ssub.s32 %s21, %s28
      %s35 = sor.u32 %s33, %s34
      %p36 = scmp.eq.s32.totalorder %s35, 0
      %s38 = sadd.s32 %s37, 1
      %s39 = scalar_select %p36, %s37, %s38
      %p42 = pneg %p36
      %p43 = scmp.eq.s32.totalorder %s13, 1
      %p44 = por %p42, %p43
      %p45 = scmp.ne.s32.totalorder %s37, %s40
      %p46 = scmp.eq.s32.totalorder %s13, 0
      %p47 = por %p45, %p46
      %p48 = scmp.ne.s32.totalorder %s37, %s40
      %p49 = scmp.eq.s32.totalorder %s18, 1
      %p50 = por %p48, %p49
      %p51 = scmp.ne.s32.totalorder %s40, %s41
      %p52 = scmp.eq.s32.totalorder %s18, 0
      %p53 = por %p51, %p52
      %p54 = scmp.ne.s32.totalorder %s40, %s41
      %p55 = scmp.eq.s32.totalorder %s19, 1
      %p56 = por %p54, %p55
      %p58 = scmp.ne.s32.totalorder %s41, %s57
      %p59 = scmp.eq.s32.totalorder %s19, 0
      %p60 = por %p58, %p59
      %s61 = ssub.s32 %s20, %s32
      %s62 = ssub.s32 %s21, %s28
      %s63 = sor.u32 %s61, %s62
      %p64 = scmp.eq.s32.totalorder %s63, 0
      %s66 = sadd.s32 %s65, 1
      %s67 = scalar_select %p64, %s65, %s66
      %p70 = pneg %p64
      %p71 = scmp.eq.s32.totalorder %s13, 1
      %p72 = por %p70, %p71
      %p73 = scmp.ne.s32.totalorder %s65, %s68
      %p74 = scmp.eq.s32.totalorder %s13, 0
      %p75 = por %p73, %p74
      %p76 = scmp.ne.s32.totalorder %s65, %s68
      %p77 = scmp.eq.s32.totalorder %s18, 1
      %p78 = por %p76, %p77
      %p79 = scmp.ne.s32.totalorder %s68, %s69
      %p80 = scmp.eq.s32.totalorder %s18, 0
      %p81 = por %p79, %p80
      %p82 = scmp.ne.s32.totalorder %s68, %s69
      %p83 = scmp.eq.s32.totalorder %s19, 1
      %p84 = por %p82, %p83
      %p86 = scmp.ne.s32.totalorder %s69, %s85
      %p87 = scmp.eq.s32.totalorder %s19, 0
      %p88 = por %p86, %p87
      %s90 = sadd.s32 %s89, 1
      %p93 = scmp.eq.s32.totalorder %s13, 1
      %p94 = scmp.ne.s32.totalorder %s89, %s91
      %p95 = scmp.eq.s32.totalorder %s13, 0
      %p96 = por %p94, %p95
      %p97 = scmp.ne.s32.totalorder %s89, %s91
      %p98 = scmp.eq.s32.totalorder %s18, 1
      %p99 = por %p97, %p98
      %p100 = scmp.ne.s32.totalorder %s91, %s92
      %p101 = scmp.eq.s32.totalorder %s18, 0
      %p102 = por %p100, %p101
      %p103 = scmp.ne.s32.totalorder %s91, %s92
      %p104 = scmp.eq.s32.totalorder %s19, 1
      %p105 = por %p103, %p104
      %p107 = scmp.ne.s32.totalorder %s92, %s106
      %p108 = scmp.eq.s32.totalorder %s19, 0
      %p109 = por %p107, %p108
      %s111 = sadd.s32 %s110, 1
      %p114 = scmp.eq.s32.totalorder %s13, 1
      %p115 = scmp.ne.s32.totalorder %s110, %s112
      %p116 = scmp.eq.s32.totalorder %s13, 0
      %p117 = por %p115, %p116
      %p118 = scmp.ne.s32.totalorder %s110, %s112
      %p119 = scmp.eq.s32.totalorder %s18, 1
      %p120 = por %p118, %p119
      %p121 = scmp.ne.s32.totalorder %s112, %s113
      %p122 = scmp.eq.s32.totalorder %s18, 0
      %p123 = por %p121, %p122
      %p124 = scmp.ne.s32.totalorder %s112, %s113
      %p125 = scmp.eq.s32.totalorder %s19, 1
      %p126 = por %p124, %p125
      %p128 = scmp.ne.s32.totalorder %s113, %s127
      %p129 = scmp.eq.s32.totalorder %s19, 0
      %p130 = por %p128, %p129
      %s132 = sadd.s32 %s131, 1
      %p135 = scmp.eq.s32.totalorder %s13, 1
      %p136 = scmp.ne.s32.totalorder %s131, %s133
      %p137 = scmp.eq.s32.totalorder %s13, 0
      %p138 = por %p136, %p137
      %p139 = scmp.ne.s32.totalorder %s131, %s133
      %p140 = scmp.eq.s32.totalorder %s18, 1
      %p141 = por %p139, %p140
      %p142 = scmp.ne.s32.totalorder %s133, %s134
      %p143 = scmp.eq.s32.totalorder %s18, 0
      %p144 = por %p142, %p143
      %p145 = scmp.ne.s32.totalorder %s133, %s134
      %p146 = scmp.eq.s32.totalorder %s19, 1
      %p147 = por %p145, %p146
      %p149 = scmp.ne.s32.totalorder %s134, %s148
      %p150 = scmp.eq.s32.totalorder %s19, 0
      %p151 = por %p149, %p150
      %s153 = sadd.s32 %s152, 1
      %p156 = scmp.eq.s32.totalorder %s13, 1
      %p157 = scmp.ne.s32.totalorder %s152, %s154
      %p158 = scmp.eq.s32.totalorder %s13, 0
      %p159 = por %p157, %p158
      %p160 = scmp.ne.s32.totalorder %s152, %s154
      %p161 = scmp.eq.s32.totalorder %s18, 1
      %p162 = por %p160, %p161
      %p163 = scmp.ne.s32.totalorder %s154, %s155
      %p164 = scmp.eq.s32.totalorder %s18, 0
      %p165 = por %p163, %p164
      %p166 = scmp.ne.s32.totalorder %s154, %s155
      %p167 = scmp.eq.s32.totalorder %s19, 1
      %p168 = por %p166, %p167
      %p170 = scmp.ne.s32.totalorder %s155, %s169
      %p171 = scmp.eq.s32.totalorder %s19, 0
      %p172 = por %p170, %p171
      %s173 = ssub.s32 %s20, %s32
      %p174 = scmp.eq.s32.totalorder %s173, 0
      %s176 = sadd.s32 %s175, 1
      %s177 = scalar_select %p174, %s175, %s176
      %p180 = pneg %p174
      %p181 = scmp.eq.s32.totalorder %s13, 1
      %p182 = por %p180, %p181
      %p183 = scmp.ne.s32.totalorder %s175, %s178
      %p184 = scmp.eq.s32.totalorder %s13, 0
      %p185 = por %p183, %p184
      %p186 = scmp.ne.s32.totalorder %s175, %s178
      %p187 = scmp.eq.s32.totalorder %s18, 1
      %p188 = por %p186, %p187
      %p189 = scmp.ne.s32.totalorder %s178, %s179
      %p190 = scmp.eq.s32.totalorder %s18, 0
      %p191 = por %p189, %p190
      %p192 = scmp.ne.s32.totalorder %s178, %s179
      %p193 = scmp.eq.s32.totalorder %s19, 1
      %p194 = por %p192, %p193
      %p196 = scmp.ne.s32.totalorder %s179, %s195
      %p197 = scmp.eq.s32.totalorder %s19, 0
      %p198 = por %p196, %p197
      %p199 = scmp.le.s32.totalorder 1, %s13
      %p200 = scmp.lt.s32.totalorder %s13, 3
      %p201 = pnand %p199, %p200
      %p202 = pneg %p201
      // Predicated region
      $region9: #{tpu_custom_call.1} parent=5 // pred_check
        _
      $region10: #{tpu_custom_call.1} parent=5 // pred_check_branch
        %204 = sbr.rel (%p201) target = $region12
      $region11: #{tpu_custom_call.1} parent=5 // pred_region
        %s205 = ssub.s32 %s13, 1
        // Predicated region
        $region13: #{tpu_custom_call.1} parent=11 // pred_check
          %p206 = pneg %p102
        $region14: #{tpu_custom_call.1} parent=11 // pred_check_branch
          %208 = sbr.rel (%p206) target = $region16
        $region15: #{tpu_custom_call.1} parent=11 // pred_region
          _
        $region16: #{tpu_custom_call.1} parent=11 // pred_fallthru
          _
        // Predicated region
        $region17: #{tpu_custom_call.1} parent=11 // pred_check
          %p209 = pneg %p123
        $region18: #{tpu_custom_call.1} parent=11 // pred_check_branch
          %211 = sbr.rel (%p209) target = $region20
        $region19: #{tpu_custom_call.1} parent=11 // pred_region
          _
        $region20: #{tpu_custom_call.1} parent=11 // pred_fallthru
          _
        // Predicated region
        $region21: #{tpu_custom_call.1} parent=11 // pred_check
          %p212 = pneg %p144
        $region22: #{tpu_custom_call.1} parent=11 // pred_check_branch
          %214 = sbr.rel (%p212) target = $region24
        $region23: #{tpu_custom_call.1} parent=11 // pred_region
          _
        $region24: #{tpu_custom_call.1} parent=11 // pred_fallthru
          _
        // Predicated region
        $region25: #{tpu_custom_call.1} parent=11 // pred_check
          %p215 = pneg %p165
        $region26: #{tpu_custom_call.1} parent=11 // pred_check_branch
          %217 = sbr.rel (%p215) target = $region28
        $region27: #{tpu_custom_call.1} parent=11 // pred_region
          _
        $region28: #{tpu_custom_call.1} parent=11 // pred_fallthru
          _
      $region12: #{tpu_custom_call.1} parent=5 // pred_fallthru
        _
      %p218 = scmp.lt.s32.totalorder %s13, 2
      // Predicated region
      $region29: #{tpu_custom_call.1} parent=5 // pred_check
        %p219 = pneg %p218
      $region30: #{tpu_custom_call.1} parent=5 // pred_check_branch
        %221 = sbr.rel (%p219) target = $region32
      $region31: #{tpu_custom_call.1} parent=5 // pred_region
        // Predicated region
        $region33: #{tpu_custom_call.1} parent=31 // pred_check
          %p222 = pneg %p47
        $region34: #{tpu_custom_call.1} parent=31 // pred_check_branch
          %224 = sbr.rel (%p222) target = $region36
        $region35: #{tpu_custom_call.1} parent=31 // pred_region
          %s225 = sand.u32 %s37, 1
          %s226 = sand.u32 %s37, 1
          %s227 = smul.addr %s226, 16
          %s228 = scalar_lea.vmem [#allocation4], %s227
          %s229 = smul.u32 2, %s20
          %s230 = smul.u32 2, %s21
          %s231 = smul.addr %s229, 4
          %s232 = sadd.s32 %s230, %s231
          %s233 = smul.addr %s232, 4
          %s234 = scalar_lea.vmem %s0, %s233
          // Predicated region
          $region37: #{tpu_custom_call.1} parent=35 // pred_check
            _
          $region38: #{tpu_custom_call.1} parent=35 // pred_check_branch
            %236 = sbr.rel (0) target = $region40
          $region39: #{tpu_custom_call.1} parent=35 // pred_region
            // Predicated region
            $region41: #{tpu_custom_call.1} parent=39 // pred_check
              _
            $region42: #{tpu_custom_call.1} parent=39 // pred_check_branch
              %238 = sbr.rel target = $region44
            $region43: #{tpu_custom_call.1} parent=39 // pred_region
              // Predicated region
              $region56: #{tpu_custom_call.1} parent=43 // pred_check
                _
              $region57: #{tpu_custom_call.1} parent=43 // pred_check_branch
                %259 = sbr.rel (0) target = $region59
              $region58: #{tpu_custom_call.1} parent=43 // pred_region
                loop: start=0, step=1, limit=1
                $region60: #{tpu_custom_call.1} parent=58 // loop_pre_header
                  _
                $region61: #{tpu_custom_call.1} parent=58 // loop_header
                  %s261 = sphi 0, %s265
                  %p262 = scmp.ge.s32.totalorder %s261, 1
                  %s266 = sphi %s234, %s234
                  %s267 = sphi %s228, %s228
                $region62: #{tpu_custom_call.1} parent=58 // loop_header_branch
                  %264 = sbr.rel (%p262) target = $region66
                $region63: #{tpu_custom_call.1} parent=58 // loop_body
                  _
                $region64: #{tpu_custom_call.1} parent=58 // loop_footer
                  %s265 = sadd.s32 1, %s261
                $region65: #{tpu_custom_call.1} parent=58 // loop_footer_branch
                  %260 = sbr.rel target = $region61
                $region66: #{tpu_custom_call.1} parent=58 // loop_exit
                  _
                loop: start=0, step=1, limit=1
                $region67: #{tpu_custom_call.1} parent=58 // loop_pre_header
                  _
                $region68: #{tpu_custom_call.1} parent=58 // loop_header
                  %s270 = sphi 0, %s274
                  %p271 = scmp.ge.s32.totalorder %s270, 1
                  %s275 = sphi %s234, %s234
                  %s276 = sphi %s228, %s228
                $region69: #{tpu_custom_call.1} parent=58 // loop_header_branch
                  %273 = sbr.rel (%p271) target = $region73
                $region70: #{tpu_custom_call.1} parent=58 // loop_body
                  %v277 = vld [vmem:[%s275] sm:$0xf]
                  %278 = vst [vmem:[%s276] sm:$0xf] %v277
                  %v279 = vld [vmem:[%s275 + $0x4] sm:$0xf]
                  %280 = vst [vmem:[%s276 + $0x4] sm:$0xf] %v279
                  %v281 = vld [vmem:[%s275 + $0x10] sm:$0xf]
                  %282 = vst [vmem:[%s276 + $0x8] sm:$0xf] %v281
                  %v283 = vld [vmem:[%s275 + $0x14] sm:$0xf]
                  %284 = vst [vmem:[%s276 + $0xc] sm:$0xf] %v283
                $region71: #{tpu_custom_call.1} parent=58 // loop_footer
                  %s274 = sadd.s32 1, %s270
                $region72: #{tpu_custom_call.1} parent=58 // loop_footer_branch
                  %269 = sbr.rel target = $region68
                $region73: #{tpu_custom_call.1} parent=58 // loop_exit
                  _
              $region59: #{tpu_custom_call.1} parent=43 // pred_fallthru
                _
            $region44: #{tpu_custom_call.1} parent=39 // pred_fallthru
              _
            // Predicated region
            $region45: #{tpu_custom_call.1} parent=39 // pred_check
              _
            $region46: #{tpu_custom_call.1} parent=39 // pred_check_branch
              %240 = sbr.rel (0) target = $region48
            $region47: #{tpu_custom_call.1} parent=39 // pred_region
              loop: start=0, step=1, limit=1
              $region49: #{tpu_custom_call.1} parent=47 // loop_pre_header
                _
              $region50: #{tpu_custom_call.1} parent=47 // loop_header
                %s243 = sphi 0, %s247
                %p244 = scmp.ge.s32.totalorder %s243, 1
                %s248 = sphi %s234, %s234
                %s249 = sphi %s228, %s228
              $region51: #{tpu_custom_call.1} parent=47 // loop_header_branch
                %246 = sbr.rel (%p244) target = $region55
              $region52: #{tpu_custom_call.1} parent=47 // loop_body
                %v250 = vld [vmem:[%s248] sm:$0xf]
                %251 = vst [vmem:[%s249] sm:$0xf] %v250
                %v252 = vld [vmem:[%s248 + $0x4] sm:$0xf]
                %253 = vst [vmem:[%s249 + $0x4] sm:$0xf] %v252
                %v254 = vld [vmem:[%s248 + $0x10] sm:$0xf]
                %255 = vst [vmem:[%s249 + $0x8] sm:$0xf] %v254
                %v256 = vld [vmem:[%s248 + $0x14] sm:$0xf]
                %257 = vst [vmem:[%s249 + $0xc] sm:$0xf] %v256
              $region53: #{tpu_custom_call.1} parent=47 // loop_footer
                %s247 = sadd.s32 1, %s243
              $region54: #{tpu_custom_call.1} parent=47 // loop_footer_branch
                %242 = sbr.rel target = $region50
              $region55: #{tpu_custom_call.1} parent=47 // loop_exit
                _
            $region48: #{tpu_custom_call.1} parent=39 // pred_fallthru
              _
          $region40: #{tpu_custom_call.1} parent=35 // pred_fallthru
            _
          %285 = vnop
        $region36: #{tpu_custom_call.1} parent=31 // pred_fallthru
          _
        // Predicated region
        $region74: #{tpu_custom_call.1} parent=31 // pred_check
          %p286 = pneg %p75
        $region75: #{tpu_custom_call.1} parent=31 // pred_check_branch
          %288 = sbr.rel (%p286) target = $region77
        $region76: #{tpu_custom_call.1} parent=31 // pred_region
          %s289 = sand.u32 %s65, 1
          %s290 = sand.u32 %s65, 1
          %s291 = smul.addr %s290, 16
          %s292 = scalar_lea.vmem [#allocation5], %s291
          %s293 = smul.u32 2, %s20
          %s294 = smul.u32 2, %s21
          %s295 = smul.addr %s293, 4
          %s296 = sadd.s32 %s294, %s295
          %s297 = smul.addr %s296, 4
          %s298 = scalar_lea.vmem %s1, %s297
          // Predicated region
          $region78: #{tpu_custom_call.1} parent=76 // pred_check
            _
          $region79: #{tpu_custom_call.1} parent=76 // pred_check_branch
            %300 = sbr.rel (0) target = $region81
          $region80: #{tpu_custom_call.1} parent=76 // pred_region
            // Predicated region
            $region82: #{tpu_custom_call.1} parent=80 // pred_check
              _
            $region83: #{tpu_custom_call.1} parent=80 // pred_check_branch
              %302 = sbr.rel target = $region85
            $region84: #{tpu_custom_call.1} parent=80 // pred_region
              // Predicated region
              $region97: #{tpu_custom_call.1} parent=84 // pred_check
                _
              $region98: #{tpu_custom_call.1} parent=84 // pred_check_branch
                %323 = sbr.rel (0) target = $region100
              $region99: #{tpu_custom_call.1} parent=84 // pred_region
                loop: start=0, step=1, limit=1
                $region101: #{tpu_custom_call.1} parent=99 // loop_pre_header
                  _
                $region102: #{tpu_custom_call.1} parent=99 // loop_header
                  %s325 = sphi 0, %s329
                  %p326 = scmp.ge.s32.totalorder %s325, 1
                  %s330 = sphi %s298, %s298
                  %s331 = sphi %s292, %s292
                $region103: #{tpu_custom_call.1} parent=99 // loop_header_branch
                  %328 = sbr.rel (%p326) target = $region107
                $region104: #{tpu_custom_call.1} parent=99 // loop_body
                  _
                $region105: #{tpu_custom_call.1} parent=99 // loop_footer
                  %s329 = sadd.s32 1, %s325
                $region106: #{tpu_custom_call.1} parent=99 // loop_footer_branch
                  %324 = sbr.rel target = $region102
                $region107: #{tpu_custom_call.1} parent=99 // loop_exit
                  _
                loop: start=0, step=1, limit=1
                $region108: #{tpu_custom_call.1} parent=99 // loop_pre_header
                  _
                $region109: #{tpu_custom_call.1} parent=99 // loop_header
                  %s334 = sphi 0, %s338
                  %p335 = scmp.ge.s32.totalorder %s334, 1
                  %s339 = sphi %s298, %s298
                  %s340 = sphi %s292, %s292
                $region110: #{tpu_custom_call.1} parent=99 // loop_header_branch
                  %337 = sbr.rel (%p335) target = $region114
                $region111: #{tpu_custom_call.1} parent=99 // loop_body
                  %v341 = vld [vmem:[%s339] sm:$0xf]
                  %342 = vst [vmem:[%s340] sm:$0xf] %v341
                  %v343 = vld [vmem:[%s339 + $0x4] sm:$0xf]
                  %344 = vst [vmem:[%s340 + $0x4] sm:$0xf] %v343
                  %v345 = vld [vmem:[%s339 + $0x10] sm:$0xf]
                  %346 = vst [vmem:[%s340 + $0x8] sm:$0xf] %v345
                  %v347 = vld [vmem:[%s339 + $0x14] sm:$0xf]
                  %348 = vst [vmem:[%s340 + $0xc] sm:$0xf] %v347
                $region112: #{tpu_custom_call.1} parent=99 // loop_footer
                  %s338 = sadd.s32 1, %s334
                $region113: #{tpu_custom_call.1} parent=99 // loop_footer_branch
                  %333 = sbr.rel target = $region109
                $region114: #{tpu_custom_call.1} parent=99 // loop_exit
                  _
              $region100: #{tpu_custom_call.1} parent=84 // pred_fallthru
                _
            $region85: #{tpu_custom_call.1} parent=80 // pred_fallthru
              _
            // Predicated region
            $region86: #{tpu_custom_call.1} parent=80 // pred_check
              _
            $region87: #{tpu_custom_call.1} parent=80 // pred_check_branch
              %304 = sbr.rel (0) target = $region89
            $region88: #{tpu_custom_call.1} parent=80 // pred_region
              loop: start=0, step=1, limit=1
              $region90: #{tpu_custom_call.1} parent=88 // loop_pre_header
                _
              $region91: #{tpu_custom_call.1} parent=88 // loop_header
                %s307 = sphi 0, %s311
                %p308 = scmp.ge.s32.totalorder %s307, 1
                %s312 = sphi %s298, %s298
                %s313 = sphi %s292, %s292
              $region92: #{tpu_custom_call.1} parent=88 // loop_header_branch
                %310 = sbr.rel (%p308) target = $region96
              $region93: #{tpu_custom_call.1} parent=88 // loop_body
                %v314 = vld [vmem:[%s312] sm:$0xf]
                %315 = vst [vmem:[%s313] sm:$0xf] %v314
                %v316 = vld [vmem:[%s312 + $0x4] sm:$0xf]
                %317 = vst [vmem:[%s313 + $0x4] sm:$0xf] %v316
                %v318 = vld [vmem:[%s312 + $0x10] sm:$0xf]
                %319 = vst [vmem:[%s313 + $0x8] sm:$0xf] %v318
                %v320 = vld [vmem:[%s312 + $0x14] sm:$0xf]
                %321 = vst [vmem:[%s313 + $0xc] sm:$0xf] %v320
              $region94: #{tpu_custom_call.1} parent=88 // loop_footer
                %s311 = sadd.s32 1, %s307
              $region95: #{tpu_custom_call.1} parent=88 // loop_footer_branch
                %306 = sbr.rel target = $region91
              $region96: #{tpu_custom_call.1} parent=88 // loop_exit
                _
            $region89: #{tpu_custom_call.1} parent=80 // pred_fallthru
              _
          $region81: #{tpu_custom_call.1} parent=76 // pred_fallthru
            _
          %349 = vnop
        $region77: #{tpu_custom_call.1} parent=31 // pred_fallthru
          _
      $region32: #{tpu_custom_call.1} parent=5 // pred_fallthru
        _
      %p350 = scmp.le.s32.totalorder 1, %s13
      %p351 = scmp.lt.s32.totalorder %s13, 3
      %p352 = pnand %p350, %p351
      %p353 = pneg %p352
      // Predicated region
      $region115: #{tpu_custom_call.1} parent=5 // pred_check
        _
      $region116: #{tpu_custom_call.1} parent=5 // pred_check_branch
        %355 = sbr.rel (%p352) target = $region118
      $region117: #{tpu_custom_call.1} parent=5 // pred_region
        %s356 = ssub.s32 %s13, 1
        %s357 = sand.u32 %s40, 1
        %s358 = sand.u32 %s40, 1
        %s359 = smul.addr %s358, 16
        %s360 = scalar_lea.vmem [#allocation4], %s359
        // Predicated region
        $region119: #{tpu_custom_call.1} parent=117 // pred_check
          %p361 = pneg %p53
        $region120: #{tpu_custom_call.1} parent=117 // pred_check_branch
          %363 = sbr.rel (%p361) target = $region122
        $region121: #{tpu_custom_call.1} parent=117 // pred_region
          _
        $region122: #{tpu_custom_call.1} parent=117 // pred_fallthru
          _
        %s364 = sand.u32 %s68, 1
        %s365 = sand.u32 %s68, 1
        %s366 = smul.addr %s365, 16
        %s367 = scalar_lea.vmem [#allocation5], %s366
        // Predicated region
        $region123: #{tpu_custom_call.1} parent=117 // pred_check
          %p368 = pneg %p81
        $region124: #{tpu_custom_call.1} parent=117 // pred_check_branch
          %370 = sbr.rel (%p368) target = $region126
        $region125: #{tpu_custom_call.1} parent=117 // pred_region
          _
        $region126: #{tpu_custom_call.1} parent=117 // pred_fallthru
          _
        %s371 = sand.u32 %s40, 1
        %s372 = sand.u32 %s40, 1
        %s373 = smul.addr %s372, 16
        %s374 = scalar_lea.vmem [#allocation4], %s373
        %p375 = pneg %p53
        %p376 = pneg %p50
        %s377 = sand.u32 %s68, 1
        %s378 = sand.u32 %s68, 1
        %s379 = smul.addr %s378, 16
        %s380 = scalar_lea.vmem [#allocation5], %s379
        %p381 = pneg %p81
        %p382 = pneg %p78
        %p383 = pneg %p102
        %p384 = pneg %p99
        %p385 = pneg %p123
        %p386 = pneg %p120
        %p387 = pneg %p144
        %p388 = pneg %p141
        %p389 = pneg %p165
        %p390 = pneg %p162
        %p391 = pneg %p191
        %p392 = pneg %p188
        %s393 = smul.u32 2, %s22
        %s394 = smul.u32 2, %s23
        %s395 = smul.u32 2, %s22
        %s396 = smul.u32 2, %s23
        %p397 = scmp.eq.s32.totalorder %s23, 0
        // Predicated region
        $region127: #{tpu_custom_call.1} parent=117 // pred_check
          %p398 = pneg %p397
        $region128: #{tpu_custom_call.1} parent=117 // pred_check_branch
          %400 = sbr.rel (%p398) target = $region130
        $region129: #{tpu_custom_call.1} parent=117 // pred_region
          %vm401 = vcmask 254976
          %402 = vst.msk [vmem:[#allocation2] sm:$0x3] %vm401, 0.0
          %vm403 = vcmask 1024
          %404 = vst.msk [vmem:[#allocation3] sm:$0x3] %vm403, 0.0
        $region130: #{tpu_custom_call.1} parent=117 // pred_fallthru
          _
        %v405 = vld [vmem:[%s360] sm:$0xf]
        %v406 = vld [vmem:[%s360 + $0x4] sm:$0xf]
        %v407 = vld [vmem:[%s360 + $0x8] sm:$0xf]
        %v408 = vld [vmem:[%s360 + $0xc] sm:$0xf]
        %v409 = vunpack.c.l.bf16 %v405
        %v410 = vunpack.c.l.bf16 %v406
        %v411 = vunpack.c.l.bf16 %v407
        %v412 = vunpack.c.l.bf16 %v408
        %v413 = vld [vmem:[%s367] sm:$0xf]
        %v414 = vld [vmem:[%s367 + $0x4] sm:$0xf]
        %v415 = vld [vmem:[%s367 + $0x8] sm:$0xf]
        %v416 = vld [vmem:[%s367 + $0xc] sm:$0xf]
        %v417 = vunpack.c.l.bf16 %v413
        %v418 = vunpack.c.l.bf16 %v414
        %v419 = vunpack.c.l.bf16 %v415
        %v420 = vunpack.c.l.bf16 %v416
        %v421 = vld [vmem:[#allocation2] sm:$0x3]
        %423 = vset.pattern.permute.xlu0 0
        %424 = vperm.xlu0 %423, %v417
        %v425 = vpop.permute.xlu0 %424
        %428 = vset.pattern.permute.xlu0 0
        %429 = vperm.xlu0 %428, %v418
        %v430 = vpop.permute.xlu0 %429
        %433 = vset.pattern.permute.xlu0 0
        %434 = vperm.xlu0 %433, %v419
        %v435 = vpop.permute.xlu0 %434
        %438 = vset.pattern.permute.xlu0 0
        %439 = vperm.xlu0 %438, %v420
        %v440 = vpop.permute.xlu0 %439
        %v442 = vmul.f32 %v409, %v425
        %v443 = vmul.f32 %v410, %v430
        %v444 = vmul.f32 %v411, %v435
        %v445 = vmul.f32 %v412, %v440
        %vm446 = vcmask 261120
        %v447 = vsel %vm446, %v442, 0.0
        %v448 = vsel %vm446, %v443, 0.0
        %v449 = vadd.f32 %v447, %v448
        %v450 = vrot.slane %v449, 4
        %v451 = vadd.f32 %v449, %v450
        %v452 = vrot.slane %v451, 2
        %v453 = vadd.f32 %v451, %v452
        %v454 = vrot.slane %v453, 1
        %v455 = vadd.f32 %v453, %v454
        %v456 = vsel %vm446, %v444, 0.0
        %v457 = vsel %vm446, %v445, 0.0
        %v458 = vadd.f32 %v456, %v457
        %v459 = vrot.slane %v458, 4
        %v460 = vadd.f32 %v458, %v459
        %v461 = vrot.slane %v460, 2
        %v462 = vadd.f32 %v460, %v461
        %v463 = vrot.slane %v462, 1
        %v464 = vadd.f32 %v462, %v463
        %vm467 = vcmask 1041409
        %v468 = vsel %vm467, %v464, %v455
        %v470 = vadd.f32 %v421, %v468
        %vm471 = vcmask 254976
        %472 = vst.msk [vmem:[#allocation2] sm:$0x3] %vm471, %v470
        %v473 = vld [vmem:[#allocation3] sm:$0x3]
        %vm474 = vcmask 7168
        %v475 = vsel %vm474, %v417, 0.0
        %v476 = vsel %vm474, %v418, 0.0
        %v477 = vadd.f32 %v475, %v476
        %v478 = vrot.slane %v477, 4
        %v479 = vadd.f32 %v477, %v478
        %v480 = vrot.slane %v479, 2
        %v481 = vadd.f32 %v479, %v480
        %v482 = vrot.slane %v481, 1
        %v483 = vadd.f32 %v481, %v482
        %v484 = vsel %vm474, %v419, 0.0
        %v485 = vsel %vm474, %v420, 0.0
        %v486 = vadd.f32 %v484, %v485
        %v487 = vrot.slane %v486, 4
        %v488 = vadd.f32 %v486, %v487
        %v489 = vrot.slane %v488, 2
        %v490 = vadd.f32 %v488, %v489
        %v491 = vrot.slane %v490, 1
        %v492 = vadd.f32 %v490, %v491
        %v495 = vsel %vm467, %v492, %v483
        %v497 = vadd.f32 %v473, %v495
        %vm498 = vcmask 1024
        %499 = vst.msk [vmem:[#allocation3] sm:$0x3] %vm498, %v497
        %p500 = scmp.eq.s32.totalorder %s23, 1
        // Predicated region
        $region131: #{tpu_custom_call.1} parent=117 // pred_check
          %p501 = pneg %p500
        $region132: #{tpu_custom_call.1} parent=117 // pred_check_branch
          %503 = sbr.rel (%p501) target = $region134
        $region133: #{tpu_custom_call.1} parent=117 // pred_region
          %v504 = vld [vmem:[#allocation3] sm:$0x3]
          %v505 = vmax.f32 %v504, 1e-09
          %v506 = vld [vmem:[#allocation2] sm:$0x3]
          %v507 = vrcp.pop %v505
          %509 = vset.pattern.permute.xlu0 0
          %510 = vperm.xlu0 %509, %v507
          %v511 = vpop.permute.xlu0 %510
          %v513 = vmul.f32 %v506, %v511
          %v514 = vld [vmem:[%s2] sm:$0xff]
          %v515 = vld [vmem:[%s2 + $0x8] sm:$0xff]
          %v516 = vld [vmem:[%s2 + $0x10] sm:$0xff]
          %v517 = vld [vmem:[%s2 + $0x18] sm:$0xff]
          %v518 = vld [vmem:[%s3] sm:$0x1]
          %v520 = vlaneseq
          %v521 = vshrl.u32 %v520, 7
          %v522 = vsub.s32 0, %v521
          %v523 = vrot.slane %v518, %v522
          %v526 = vsel %vm446, %v513, 0
          %528 = vmatprep.subr.mxu0 0.0
          %529 = vmatpush1.msra.mxu0 %v514
          %530 = vmatprep.subr.mxu0 0.0
          %531 = vmatpush1.msra.mxu0 %v515
          %532 = vmatprep.subr.mxu0 0.0
          %533 = vmatpush1.msra.mxu0 %v516
          %534 = vmatprep.subr.mxu0 0.0
          %535 = vmatpush1.msra.mxu0 %v517
          %536 = vmatprep.subr.mxu0 0.0
          %537 = vmatpush1.msra.mxu0 0.0
          %538 = vmatprep.subr.mxu0 0.0
          %539 = vmatpush1.msra.mxu0 0.0
          %540 = vmatprep.subr.mxu0 0.0
          %541 = vmatpush1.msra.mxu0 0.0
          %542 = vmatprep.subr.mxu0 0.0
          %543 = vmatpush1.msra.mxu0 0.0
          %544 = vmatprep.subr.mxu0 0.0
          %545 = vmatpush1.msra.mxu0 0.0
          %546 = vmatprep.subr.mxu0 0.0
          %547 = vmatpush1.msra.mxu0 0.0
          %548 = vmatprep.subr.mxu0 0.0
          %549 = vmatpush1.msra.mxu0 0.0
          %550 = vmatprep.subr.mxu0 0.0
          %551 = vmatpush1.msra.mxu0 0.0
          %552 = vmatprep.subr.mxu0 0.0
          %553 = vmatpush1.msra.mxu0 0.0
          %554 = vmatprep.subr.mxu0 0.0
          %555 = vmatpush1.msra.mxu0 0.0
          %556 = vmatprep.subr.mxu0 0.0
          %557 = vmatpush1.msra.mxu0 0.0
          %558 = vmatprep.subr.mxu0 0.0
          %559 = vmatpush1.msra.mxu0 0.0
          %560 = vmatprep.subr.mxu0 0.0
          %561 = vmatpush1.msra.mxu0 0.0
          %562 = vmatprep.subr.mxu0 0.0
          %563 = vmatpush1.msra.mxu0 0.0
          %564 = vmatprep.subr.mxu0 0.0
          %565 = vmatpush1.msra.mxu0 0.0
          %566 = vmatprep.subr.mxu0 0.0
          %567 = vmatpush1.msra.mxu0 0.0
          %568 = vmatprep.subr.mxu0 0.0
          %569 = vmatpush1.msra.mxu0 0.0
          %570 = vmatprep.subr.mxu0 0.0
          %571 = vmatpush1.msra.mxu0 0.0
          %572 = vmatprep.subr.mxu0 0.0
          %573 = vmatpush1.msra.mxu0 0.0
          %574 = vmatprep.subr.mxu0 0.0
          %575 = vmatpush1.msra.mxu0 0.0
          %576 = vmatprep.subr.mxu0 0.0
          %577 = vmatpush1.msra.mxu0 0.0
          %578 = vmatprep.subr.mxu0 0.0
          %579 = vmatpush1.msra.mxu0 0.0
          %580 = vmatprep.subr.mxu0 0.0
          %581 = vmatpush1.msra.mxu0 0.0
          %582 = vmatprep.subr.mxu0 0.0
          %583 = vmatpush1.msra.mxu0 0.0
          %584 = vmatprep.subr.mxu0 0.0
          %585 = vmatpush1.msra.mxu0 0.0
          %586 = vmatprep.subr.mxu0 0.0
          %587 = vmatpush1.msra.mxu0 0.0
          %588 = vmatprep.subr.mxu0 0.0
          %589 = vmatpush1.msra.mxu0 0.0
          %590 = vmatprep.subr.mxu0 0.0
          %591 = vmatpush1.msra.mxu0 0.0
          %592 = vmatprep.mubr.f32.mxu0 0.0
          %593 = vmatmul.mubr.f32.gmra.mrb[0].mxu0 %v526
          %v594 = vpop.f32.mrb[0].mxu0
          %v595 = vadd.f32 %v523, %v594
          %v596 = vpop.f32.mrb[0].mxu0
          %597 = vdwg.mxu0
          %v598 = vmax.f32 %v595, 0.0
          %v599 = vld [vmem:[%s4] sm:$0xff]
          %v600 = vld [vmem:[%s4 + $0x8] sm:$0xff]
          %v601 = vld [vmem:[%s4 + $0x10] sm:$0xff]
          %v602 = vld [vmem:[%s4 + $0x18] sm:$0xff]
          %v603 = vld [vmem:[%s4 + $0x20] sm:$0xff]
          %v604 = vld [vmem:[%s4 + $0x28] sm:$0xff]
          %v605 = vld [vmem:[%s4 + $0x30] sm:$0xff]
          %v606 = vld [vmem:[%s4 + $0x38] sm:$0xff]
          %v607 = vld [vmem:[%s4 + $0x40] sm:$0xff]
          %v608 = vld [vmem:[%s4 + $0x48] sm:$0xff]
          %v609 = vld [vmem:[%s4 + $0x50] sm:$0xff]
          %v610 = vld [vmem:[%s4 + $0x58] sm:$0xff]
          %v611 = vld [vmem:[%s4 + $0x60] sm:$0xff]
          %v612 = vld [vmem:[%s4 + $0x68] sm:$0xff]
          %v613 = vld [vmem:[%s4 + $0x70] sm:$0xff]
          %v614 = vld [vmem:[%s4 + $0x78] sm:$0xff]
          %v615 = vld [vmem:[%s5] sm:$0x1]
          %v617 = vlaneseq
          %v618 = vshrl.u32 %v617, 7
          %v619 = vsub.s32 0, %v618
          %v620 = vrot.slane %v615, %v619
          %622 = vmatprep.subr.mxu0 0.0
          %623 = vmatpush1.msra.mxu0 %v599
          %624 = vmatprep.subr.mxu0 0.0
          %625 = vmatpush1.msra.mxu0 %v600
          %626 = vmatprep.subr.mxu0 0.0
          %627 = vmatpush1.msra.mxu0 %v601
          %628 = vmatprep.subr.mxu0 0.0
          %629 = vmatpush1.msra.mxu0 %v602
          %630 = vmatprep.subr.mxu0 0.0
          %631 = vmatpush1.msra.mxu0 %v603
          %632 = vmatprep.subr.mxu0 0.0
          %633 = vmatpush1.msra.mxu0 %v604
          %634 = vmatprep.subr.mxu0 0.0
          %635 = vmatpush1.msra.mxu0 %v605
          %636 = vmatprep.subr.mxu0 0.0
          %637 = vmatpush1.msra.mxu0 %v606
          %638 = vmatprep.subr.mxu0 0.0
          %639 = vmatpush1.msra.mxu0 %v607
          %640 = vmatprep.subr.mxu0 0.0
          %641 = vmatpush1.msra.mxu0 %v608
          %642 = vmatprep.subr.mxu0 0.0
          %643 = vmatpush1.msra.mxu0 %v609
          %644 = vmatprep.subr.mxu0 0.0
          %645 = vmatpush1.msra.mxu0 %v610
          %646 = vmatprep.subr.mxu0 0.0
          %647 = vmatpush1.msra.mxu0 %v611
          %648 = vmatprep.subr.mxu0 0.0
          %649 = vmatpush1.msra.mxu0 %v612
          %650 = vmatprep.subr.mxu0 0.0
          %651 = vmatpush1.msra.mxu0 %v613
          %652 = vmatprep.subr.mxu0 0.0
          %653 = vmatpush1.msra.mxu0 %v614
          %654 = vmatprep.subr.mxu0 0.0
          %655 = vmatpush1.msra.mxu0 0.0
          %656 = vmatprep.subr.mxu0 0.0
          %657 = vmatpush1.msra.mxu0 0.0
          %658 = vmatprep.subr.mxu0 0.0
          %659 = vmatpush1.msra.mxu0 0.0
          %660 = vmatprep.subr.mxu0 0.0
          %661 = vmatpush1.msra.mxu0 0.0
          %662 = vmatprep.subr.mxu0 0.0
          %663 = vmatpush1.msra.mxu0 0.0
          %664 = vmatprep.subr.mxu0 0.0
          %665 = vmatpush1.msra.mxu0 0.0
          %666 = vmatprep.subr.mxu0 0.0
          %667 = vmatpush1.msra.mxu0 0.0
          %668 = vmatprep.subr.mxu0 0.0
          %669 = vmatpush1.msra.mxu0 0.0
          %670 = vmatprep.subr.mxu0 0.0
          %671 = vmatpush1.msra.mxu0 0.0
          %672 = vmatprep.subr.mxu0 0.0
          %673 = vmatpush1.msra.mxu0 0.0
          %674 = vmatprep.subr.mxu0 0.0
          %675 = vmatpush1.msra.mxu0 0.0
          %676 = vmatprep.subr.mxu0 0.0
          %677 = vmatpush1.msra.mxu0 0.0
          %678 = vmatprep.subr.mxu0 0.0
          %679 = vmatpush1.msra.mxu0 0.0
          %680 = vmatprep.subr.mxu0 0.0
          %681 = vmatpush1.msra.mxu0 0.0
          %682 = vmatprep.subr.mxu0 0.0
          %683 = vmatpush1.msra.mxu0 0.0
          %684 = vmatprep.subr.mxu0 0.0
          %685 = vmatpush1.msra.mxu0 0.0
          %686 = vmatprep.mubr.f32.mxu0 0.0
          %687 = vmatmul.mubr.f32.gmra.mrb[0].mxu0 %v598
          %v688 = vpop.f32.mrb[0].mxu0
          %v689 = vadd.f32 %v620, %v688
          %v690 = vpop.f32.mrb[0].mxu0
          %691 = vdwg.mxu0
          %vm692 = vcmask 25600
          %693 = vst.msk [vmem:[#allocation6] sm:$0x3] %vm692, %v689
        $region134: #{tpu_custom_call.1} parent=117 // pred_fallthru
          _
        // Predicated region
        $region135: #{tpu_custom_call.1} parent=117 // pred_check
          %p694 = pneg %p188
        $region136: #{tpu_custom_call.1} parent=117 // pred_check_branch
          %696 = sbr.rel (%p694) target = $region138
        $region137: #{tpu_custom_call.1} parent=117 // pred_region
          %s698 = ssub.s32 32, 32
          %699 = vsyncadd [#allocation7], %s698
          %s700 = smul.addr %s22, 32
          %s701 = scalar_lea.hbm %s6, %s700
          %s703 = sshll.u32 [#allocation6], 4
          %s704 = int_to_ptr.vmem [resolvable:$true] %s703
          %706 = dma.vmem_to_hbm [thread:$0]  %s704, 32, %s701, [#allocation7]
        $region138: #{tpu_custom_call.1} parent=117 // pred_fallthru
          _
        // Predicated region
        $region139: #{tpu_custom_call.1} parent=117 // pred_check
          %p707 = pneg %p188
        $region140: #{tpu_custom_call.1} parent=117 // pred_check_branch
          %709 = sbr.rel (%p707) target = $region142
        $region141: #{tpu_custom_call.1} parent=117 // pred_region
          %710 = dma.done [#allocation7], 32
        $region142: #{tpu_custom_call.1} parent=117 // pred_fallthru
          _
      $region118: #{tpu_custom_call.1} parent=5 // pred_fallthru
        _
      %p711 = scmp.le.s32.totalorder 2, %s13
      // Predicated region
      $region143: #{tpu_custom_call.1} parent=5 // pred_check
        %p712 = pneg %p711
      $region144: #{tpu_custom_call.1} parent=5 // pred_check_branch
        %714 = sbr.rel (%p712) target = $region146
      $region145: #{tpu_custom_call.1} parent=5 // pred_region
        %s715 = ssub.s32 %s13, 2
      $region146: #{tpu_custom_call.1} parent=5 // pred_fallthru
        _
    $region6: #{tpu_custom_call.1} parent=1 // loop_footer
      %s17 = sadd.s32 1, %s13
    $region7: #{tpu_custom_call.1} parent=1 // loop_footer_branch
      %12 = sbr.rel target = $region3
    $region8: #{tpu_custom_call.1} parent=1 // loop_exit
      _
    %716 = vsyncpa [#allocation7], 1
    %s717 = scalar_lea.sflag [#allocation7], 1
    %718 = vsyncpa %s717, 1

</llo_original>
